<compile_context>
chip_gen: v6e
topology: v6e:2x2x1
jax: 0.10.0
libtpu: 0.0.40
codegen_flags: <defaults>
</compile_context>

<pallas_src>
import jax
import jax.numpy as jnp
from jax.experimental import pallas as pl
from jax.experimental.pallas import tpu as pltpu


def conv_im2col_kernel(x_ref, w_ref, y_ref, ssum_ref, ssq_ref):
    # x_ref:    (H+2, W+2, Cin)   padded NHWC image (batch dim squeezed by BlockSpec)
    # w_ref:    (9*Cin, Cp)       3x3 weights, row = (ky*3+kx)*Cin + c, Cout padded to Cp
    # y_ref:    (H*W, Cp)         conv output for this image (f32)
    # ssum_ref: (1, Cp)           per-image per-channel sum       (BN partial)
    # ssq_ref:  (1, Cp)           per-image per-channel sum of sq (BN partial)
    Hp, Wp, Cin = x_ref.shape
    H, W = Hp - 2, Wp - 2

    # im2col: build the patch tensor once (9 shifted views stacked along the
    # contraction dim), then a single MXU contraction with K = 9*Cin.
    pieces = [x_ref[ky:ky + H, kx:kx + W, :] for ky in range(3) for kx in range(3)]
    patch = jnp.concatenate(pieces, axis=-1).reshape(H * W, 9 * Cin)

    acc = jnp.dot(patch, w_ref[...], preferred_element_type=jnp.float32)  # (H*W, Cp)

    y_ref[...] = acc
    ssum_ref[...] = jnp.sum(acc, axis=0, keepdims=True)
    ssq_ref[...] = jnp.sum(acc * acc, axis=0, keepdims=True)


def bn_relu_kernel(y_ref, scale_ref, shift_ref, o_ref):
    # Single fused sweep: o = max(y * scale + shift, 0), per-channel scale/shift.
    o_ref[...] = jnp.maximum(
        y_ref[...] * scale_ref[...] + shift_ref[...], 0.0).astype(o_ref.dtype)


def conv_block(x_nchw, w_hwio, bias, gamma, beta, *, eps=1e-5):
    """ConvBlock forward. x_nchw: (N, Cin, H, W); w_hwio: (3, 3, Cin, Cout)."""
    N, Cin, H, W = x_nchw.shape
    Cout = w_hwio.shape[-1]
    Cp = ((Cout + 127) // 128) * 128          # lane-dense padded channel width
    HW = H * W
    Hp, Wp = H + 2, W + 2

    # NCHW -> NHWC + 1px zero halo (layout ops fused by XLA into one pass).
    # TODO(synk): fold the halo/pad (and H-tiling for large images) into the kernel
    # via an overlapping index_map / manual DMA instead of a wrapper-side jnp.pad.
    x = jnp.transpose(x_nchw, (0, 2, 3, 1))
    x_pad = jnp.pad(x, ((0, 0), (1, 1), (1, 1), (0, 0)))

    # (3,3,Cin,Cout) -> (9*Cin, Cp), zero-padding the output channels to Cp.
    w = w_hwio.reshape(9 * Cin, Cout).astype(jnp.float32)
    w = jnp.pad(w, ((0, 0), (0, Cp - Cout)))

    # Conv bias cancels exactly under train-mode BatchNorm -> drop it.
    del bias

    cparams = pltpu.CompilerParams(
        dimension_semantics=("parallel",),          # batch tiles split across TCs (v7x)
        vmem_limit_bytes=48 * 1024 * 1024)          # headroom within v7x's 64 MiB VMEM

    flops = 2 * N * HW * (9 * Cin) * Cp
    bytes_accessed = 4 * (x_pad.size + w.size + N * HW * Cp + 2 * N * Cp)

    # Pass 1: conv (single im2col matmul) + per-image BN partial statistics.
    y, ssum, ssq = pl.pallas_call(
        conv_im2col_kernel,
        grid=(N,),
        in_specs=[
            pl.BlockSpec((None, Hp, Wp, Cin), lambda n: (n, 0, 0, 0)),
            pl.BlockSpec((9 * Cin, Cp), lambda n: (0, 0)),
        ],
        out_specs=[
            pl.BlockSpec((None, HW, Cp), lambda n: (n, 0, 0)),
            pl.BlockSpec((None, 1, Cp), lambda n: (n, 0, 0)),
            pl.BlockSpec((None, 1, Cp), lambda n: (n, 0, 0)),
        ],
        out_shape=[
            jax.ShapeDtypeStruct((N, HW, Cp), jnp.float32),
            jax.ShapeDtypeStruct((N, 1, Cp), jnp.float32),
            jax.ShapeDtypeStruct((N, 1, Cp), jnp.float32),
        ],
        compiler_params=cparams,
        cost_estimate=pl.CostEstimate(flops=flops, transcendentals=0,
                                      bytes_accessed=bytes_accessed),
    )(x_pad, w)

    # Tiny (Cp,)-sized finalize of the global (N,H,W) batch statistics in f32.
    count = jnp.float32(N * HW)
    mean = jnp.sum(ssum[:, 0, :], axis=0) / count
    var = jnp.maximum(jnp.sum(ssq[:, 0, :], axis=0) / count - mean * mean, 0.0)
    gamma_p = jnp.zeros((Cp,), jnp.float32).at[:Cout].set(gamma.astype(jnp.float32))
    beta_p = jnp.zeros((Cp,), jnp.float32).at[:Cout].set(beta.astype(jnp.float32))
    inv_std = jax.lax.rsqrt(var + eps)
    scale = (gamma_p * inv_std).reshape(1, Cp)
    shift = (beta_p - mean * gamma_p * inv_std).reshape(1, Cp)

    # Pass 2: fused normalize + affine + ReLU in one lane-dense sweep.
    out = pl.pallas_call(
        bn_relu_kernel,
        grid=(N,),
        in_specs=[
            pl.BlockSpec((None, HW, Cp), lambda n: (n, 0, 0)),
            pl.BlockSpec((1, Cp), lambda n: (0, 0)),
            pl.BlockSpec((1, Cp), lambda n: (0, 0)),
        ],
        out_specs=pl.BlockSpec((None, HW, Cp), lambda n: (n, 0, 0)),
        out_shape=jax.ShapeDtypeStruct((N, HW, Cp), jnp.float32),
        compiler_params=cparams,
    )(y, scale, shift)

    out = out[:, :, :Cout].reshape(N, H, W, Cout)
    return jnp.transpose(out, (0, 3, 1, 2)).astype(x_nchw.dtype)   # NHWC -> NCHW


def reference(x_nchw, w_hwio, bias, gamma, beta):
    """Pure-JAX reference matching PyTorch ConvBlock (train-mode BN) semantics."""
    y = jax.lax.conv_general_dilated(
        x_nchw.astype(jnp.float32),
        jnp.transpose(w_hwio, (3, 2, 0, 1)).astype(jnp.float32),   # OIHW
        window_strides=(1, 1), padding=((1, 1), (1, 1)),
        dimension_numbers=('NCHW', 'OIHW', 'NCHW'))
    y = y + bias[None, :, None, None]
    mean = jnp.mean(y, axis=(0, 2, 3), keepdims=True)
    var = jnp.mean((y - mean) ** 2, axis=(0, 2, 3), keepdims=True)
    y = gamma[None, :, None, None] * (y - mean) / jnp.sqrt(var + 1e-5) \
        + beta[None, :, None, None]
    return jnp.maximum(y, 0.0)


if __name__ == "__main__":
    # Small shapes consistent with ConvBlock(in_channels=4, out_channels=8).
    N, Cin, Cout, H, W = 2, 4, 8, 16, 16

    key = jax.random.PRNGKey(0)
    k_x, k_w, k_b = jax.random.split(key, 3)

    x = jax.random.normal(k_x, (N, Cin, H, W), dtype=jnp.float32)

    # PyTorch-style uniform init bounds for the conv; BN affine defaults.
    fan_in = Cin * 3 * 3
    bound = 1.0 / (fan_in ** 0.5)
    w_hwio = jax.random.uniform(k_w, (3, 3, Cin, Cout), jnp.float32, -bound, bound)
    bias = jax.random.uniform(k_b, (Cout,), jnp.float32, -bound, bound)
    gamma = jnp.ones((Cout,), jnp.float32)
    beta = jnp.zeros((Cout,), jnp.float32)

    conv_block_jit = jax.jit(conv_block)
    out = jax.block_until_ready(conv_block_jit(x, w_hwio, bias, gamma, beta))
    ref = jax.block_until_ready(reference(x, w_hwio, bias, gamma, beta))

    assert out.shape == (N, Cout, H, W), out.shape
    max_err = float(jnp.max(jnp.abs(out - ref)))
    assert jnp.allclose(out, ref, atol=2e-4, rtol=2e-4), max_err

    print("KERNEL_OK")
</pallas_src>

<mosaic_0001>
module attributes {stable_mosaic.version = 11 : i64} {
  func.func @conv_im2col_kernel(%arg0: i32, %arg1: memref<1x18x18x4xf32, #tpu.memory_space<vmem>>, %arg2: memref<36x128xf32, #tpu.memory_space<vmem>>, %arg3: memref<1x256x128xf32, #tpu.memory_space<vmem>>, %arg4: memref<1x1x128xf32, #tpu.memory_space<vmem>>, %arg5: memref<1x1x128xf32, #tpu.memory_space<vmem>>) attributes {dimension_semantics = [#tpu.dimension_semantics<parallel>], iteration_bounds = array<i64: 2>, scalar_prefetch = 0 : i64, scratch_operands = 0 : i64, tpu.core_type = #tpu.core_type<tc>, window_params = [{transform_indices = @transform_0, window_bounds = array<i64: 1, 18, 18, 4>}, {pipeline_mode = #tpu.pipeline_mode<synchronous>, transform_indices = @transform_1, window_bounds = array<i64: 36, 128>}, {transform_indices = @transform_2, window_bounds = array<i64: 1, 256, 128>}, {transform_indices = @transform_3, window_bounds = array<i64: 1, 1, 128>}, {transform_indices = @transform_4, window_bounds = array<i64: 1, 1, 128>}]} {
    %c0 = arith.constant 0 : index
    %c0_0 = arith.constant 0 : index
    %c0_1 = arith.constant 0 : index
    %c0_2 = arith.constant 0 : index
    %0 = vector.load %arg1[%c0, %c0_0, %c0_1, %c0_2] : memref<1x18x18x4xf32, #tpu.memory_space<vmem>>, vector<1x16x16x4xf32>
    %1 = vector.shape_cast %0 : vector<1x16x16x4xf32> to vector<16x16x4xf32>
    %c0_3 = arith.constant 0 : index
    %c0_4 = arith.constant 0 : index
    %c1 = arith.constant 1 : index
    %c0_5 = arith.constant 0 : index
    %2 = vector.load %arg1[%c0_3, %c0_4, %c1, %c0_5] : memref<1x18x18x4xf32, #tpu.memory_space<vmem>>, vector<1x16x16x4xf32>
    %3 = vector.shape_cast %2 : vector<1x16x16x4xf32> to vector<16x16x4xf32>
    %c0_6 = arith.constant 0 : index
    %c0_7 = arith.constant 0 : index
    %c2 = arith.constant 2 : index
    %c0_8 = arith.constant 0 : index
    %4 = vector.load %arg1[%c0_6, %c0_7, %c2, %c0_8] : memref<1x18x18x4xf32, #tpu.memory_space<vmem>>, vector<1x16x16x4xf32>
    %5 = vector.shape_cast %4 : vector<1x16x16x4xf32> to vector<16x16x4xf32>
    %c0_9 = arith.constant 0 : index
    %c1_10 = arith.constant 1 : index
    %c0_11 = arith.constant 0 : index
    %c0_12 = arith.constant 0 : index
    %6 = vector.load %arg1[%c0_9, %c1_10, %c0_11, %c0_12] : memref<1x18x18x4xf32, #tpu.memory_space<vmem>>, vector<1x16x16x4xf32>
    %7 = vector.shape_cast %6 : vector<1x16x16x4xf32> to vector<16x16x4xf32>
    %c0_13 = arith.constant 0 : index
    %c1_14 = arith.constant 1 : index
    %c1_15 = arith.constant 1 : index
    %c0_16 = arith.constant 0 : index
    %8 = vector.load %arg1[%c0_13, %c1_14, %c1_15, %c0_16] : memref<1x18x18x4xf32, #tpu.memory_space<vmem>>, vector<1x16x16x4xf32>
    %9 = vector.shape_cast %8 : vector<1x16x16x4xf32> to vector<16x16x4xf32>
    %c0_17 = arith.constant 0 : index
    %c1_18 = arith.constant 1 : index
    %c2_19 = arith.constant 2 : index
    %c0_20 = arith.constant 0 : index
    %10 = vector.load %arg1[%c0_17, %c1_18, %c2_19, %c0_20] : memref<1x18x18x4xf32, #tpu.memory_space<vmem>>, vector<1x16x16x4xf32>
    %11 = vector.shape_cast %10 : vector<1x16x16x4xf32> to vector<16x16x4xf32>
    %c0_21 = arith.constant 0 : index
    %c2_22 = arith.constant 2 : index
    %c0_23 = arith.constant 0 : index
    %c0_24 = arith.constant 0 : index
    %12 = vector.load %arg1[%c0_21, %c2_22, %c0_23, %c0_24] : memref<1x18x18x4xf32, #tpu.memory_space<vmem>>, vector<1x16x16x4xf32>
    %13 = vector.shape_cast %12 : vector<1x16x16x4xf32> to vector<16x16x4xf32>
    %c0_25 = arith.constant 0 : index
    %c2_26 = arith.constant 2 : index
    %c1_27 = arith.constant 1 : index
    %c0_28 = arith.constant 0 : index
    %14 = vector.load %arg1[%c0_25, %c2_26, %c1_27, %c0_28] : memref<1x18x18x4xf32, #tpu.memory_space<vmem>>, vector<1x16x16x4xf32>
    %15 = vector.shape_cast %14 : vector<1x16x16x4xf32> to vector<16x16x4xf32>
    %c0_29 = arith.constant 0 : index
    %c2_30 = arith.constant 2 : index
    %c2_31 = arith.constant 2 : index
    %c0_32 = arith.constant 0 : index
    %16 = vector.load %arg1[%c0_29, %c2_30, %c2_31, %c0_32] : memref<1x18x18x4xf32, #tpu.memory_space<vmem>>, vector<1x16x16x4xf32>
    %17 = vector.shape_cast %16 : vector<1x16x16x4xf32> to vector<16x16x4xf32>
    %18 = tpu.concatenate %1, %3, %5, %7, %9, %11, %13, %15, %17 in 2 : vector<16x16x4xf32>, vector<16x16x4xf32>, vector<16x16x4xf32>, vector<16x16x4xf32>, vector<16x16x4xf32>, vector<16x16x4xf32>, vector<16x16x4xf32>, vector<16x16x4xf32>, vector<16x16x4xf32> -> vector<16x16x36xf32>
    %19 = vector.shape_cast %18 : vector<16x16x36xf32> to vector<256x36xf32>
    %c0_33 = arith.constant 0 : index
    %c0_34 = arith.constant 0 : index
    %20 = vector.load %arg2[%c0_33, %c0_34] : memref<36x128xf32, #tpu.memory_space<vmem>>, vector<36x128xf32>
    %cst = arith.constant dense<0.000000e+00> : vector<256x128xf32>
    %21 = tpu.matmul %19, %20, %cst {dimension_numbers = #tpu.dot_dimension_numbers<[1], [0], [0], [1], [0, 0, 1, 1], [], []>} : vector<256x36xf32>, vector<36x128xf32>, vector<256x128xf32> -> vector<256x128xf32>
    %c0_35 = arith.constant 0 : index
    %c0_36 = arith.constant 0 : index
    %c0_37 = arith.constant 0 : index
    %22 = vector.load %arg3[%c0_35, %c0_36, %c0_37] : memref<1x256x128xf32, #tpu.memory_space<vmem>>, vector<1x256x128xf32>
    %23 = vector.shape_cast %22 : vector<1x256x128xf32> to vector<256x128xf32>
    %24 = vector.shape_cast %21 : vector<256x128xf32> to vector<1x256x128xf32>
    tpu.vector_store %arg3[%c0_35, %c0_36, %c0_37], %24 {strides = array<i32>} : memref<1x256x128xf32, #tpu.memory_space<vmem>>, vector<1x256x128xf32>,
    %cst_38 = arith.constant dense<0.000000e+00> : vector<128xf32>
    %25 = vector.multi_reduction <add>, %21, %cst_38 [0] : vector<256x128xf32> to vector<128xf32>
    %26 = vector.shape_cast %25 : vector<128xf32> to vector<1x128xf32>
    %c0_39 = arith.constant 0 : index
    %c0_40 = arith.constant 0 : index
    %c0_41 = arith.constant 0 : index
    %27 = vector.load %arg4[%c0_39, %c0_40, %c0_41] : memref<1x1x128xf32, #tpu.memory_space<vmem>>, vector<1x1x128xf32>
    %28 = vector.shape_cast %27 : vector<1x1x128xf32> to vector<1x128xf32>
    %29 = vector.shape_cast %26 : vector<1x128xf32> to vector<1x1x128xf32>
    tpu.vector_store %arg4[%c0_39, %c0_40, %c0_41], %29 {strides = array<i32>} : memref<1x1x128xf32, #tpu.memory_space<vmem>>, vector<1x1x128xf32>,
    %30 = arith.mulf %21, %21 : vector<256x128xf32>
    %cst_42 = arith.constant dense<0.000000e+00> : vector<128xf32>
    %31 = vector.multi_reduction <add>, %30, %cst_42 [0] : vector<256x128xf32> to vector<128xf32>
    %32 = vector.shape_cast %31 : vector<128xf32> to vector<1x128xf32>
    %c0_43 = arith.constant 0 : index
    %c0_44 = arith.constant 0 : index
    %c0_45 = arith.constant 0 : index
    %33 = vector.load %arg5[%c0_43, %c0_44, %c0_45] : memref<1x1x128xf32, #tpu.memory_space<vmem>>, vector<1x1x128xf32>
    %34 = vector.shape_cast %33 : vector<1x1x128xf32> to vector<1x128xf32>
    %35 = vector.shape_cast %32 : vector<1x128xf32> to vector<1x1x128xf32>
    tpu.vector_store %arg5[%c0_43, %c0_44, %c0_45], %35 {strides = array<i32>} : memref<1x1x128xf32, #tpu.memory_space<vmem>>, vector<1x1x128xf32>,
    return
  }
  func.func @transform_0(%arg0: i32) -> (i32, i32, i32, i32) {
    %c0_i32 = arith.constant 0 : i32
    %c0_i32_0 = arith.constant 0 : i32
    %c0_i32_1 = arith.constant 0 : i32
    %c0_i32_2 = arith.constant 0 : i32
    return %arg0, %c0_i32, %c0_i32_0, %c0_i32_1 : i32, i32, i32, i32
  }
  func.func @transform_1(%arg0: i32) -> (i32, i32) {
    %c0_i32 = arith.constant 0 : i32
    %c0_i32_0 = arith.constant 0 : i32
    %c0_i32_1 = arith.constant 0 : i32
    return %c0_i32, %c0_i32_0 : i32, i32
  }
  func.func @transform_2(%arg0: i32) -> (i32, i32, i32) {
    %c0_i32 = arith.constant 0 : i32
    %c0_i32_0 = arith.constant 0 : i32
    %c0_i32_1 = arith.constant 0 : i32
    return %arg0, %c0_i32, %c0_i32_0 : i32, i32, i32
  }
  func.func @transform_3(%arg0: i32) -> (i32, i32, i32) {
    %c0_i32 = arith.constant 0 : i32
    %c0_i32_0 = arith.constant 0 : i32
    %c0_i32_1 = arith.constant 0 : i32
    return %arg0, %c0_i32, %c0_i32_0 : i32, i32, i32
  }
  func.func @transform_4(%arg0: i32) -> (i32, i32, i32) {
    %c0_i32 = arith.constant 0 : i32
    %c0_i32_0 = arith.constant 0 : i32
    %c0_i32_1 = arith.constant 0 : i32
    return %arg0, %c0_i32, %c0_i32_0 : i32, i32, i32
  }
}

module attributes {stable_mosaic.version = 11 : i64} {
  func.func @bn_relu_kernel(%arg0: i32, %arg1: memref<1x256x128xf32, #tpu.memory_space<vmem>>, %arg2: memref<1x128xf32, #tpu.memory_space<vmem>>, %arg3: memref<1x128xf32, #tpu.memory_space<vmem>>, %arg4: memref<1x256x128xf32, #tpu.memory_space<vmem>>) attributes {dimension_semantics = [#tpu.dimension_semantics<parallel>], iteration_bounds = array<i64: 2>, scalar_prefetch = 0 : i64, scratch_operands = 0 : i64, tpu.core_type = #tpu.core_type<tc>, window_params = [{transform_indices = @transform_0, window_bounds = array<i64: 1, 256, 128>}, {pipeline_mode = #tpu.pipeline_mode<synchronous>, transform_indices = @transform_1, window_bounds = array<i64: 1, 128>}, {pipeline_mode = #tpu.pipeline_mode<synchronous>, transform_indices = @transform_2, window_bounds = array<i64: 1, 128>}, {transform_indices = @transform_3, window_bounds = array<i64: 1, 256, 128>}]} {
    %c0 = arith.constant 0 : index
    %c0_0 = arith.constant 0 : index
    %c0_1 = arith.constant 0 : index
    %0 = vector.load %arg1[%c0, %c0_0, %c0_1] : memref<1x256x128xf32, #tpu.memory_space<vmem>>, vector<1x256x128xf32>
    %1 = vector.shape_cast %0 : vector<1x256x128xf32> to vector<256x128xf32>
    %c0_2 = arith.constant 0 : index
    %c0_3 = arith.constant 0 : index
    %2 = vector.load %arg2[%c0_2, %c0_3] : memref<1x128xf32, #tpu.memory_space<vmem>>, vector<1x128xf32>
    %3 = vector.broadcast %2 : vector<1x128xf32> to vector<256x128xf32>
    %4 = arith.mulf %1, %3 : vector<256x128xf32>
    %c0_4 = arith.constant 0 : index
    %c0_5 = arith.constant 0 : index
    %5 = vector.load %arg3[%c0_4, %c0_5] : memref<1x128xf32, #tpu.memory_space<vmem>>, vector<1x128xf32>
    %6 = vector.broadcast %5 : vector<1x128xf32> to vector<256x128xf32>
    %7 = arith.addf %4, %6 : vector<256x128xf32>
    %cst = arith.constant 0.000000e+00 : f32
    %8 = vector.broadcast %cst : f32 to vector<256x128xf32>
    %9 = arith.maximumf %7, %8 : vector<256x128xf32>
    %c0_6 = arith.constant 0 : index
    %c0_7 = arith.constant 0 : index
    %c0_8 = arith.constant 0 : index
    %10 = vector.load %arg4[%c0_6, %c0_7, %c0_8] : memref<1x256x128xf32, #tpu.memory_space<vmem>>, vector<1x256x128xf32>
    %11 = vector.shape_cast %10 : vector<1x256x128xf32> to vector<256x128xf32>
    %12 = vector.shape_cast %9 : vector<256x128xf32> to vector<1x256x128xf32>
    tpu.vector_store %arg4[%c0_6, %c0_7, %c0_8], %12 {strides = array<i32>} : memref<1x256x128xf32, #tpu.memory_space<vmem>>, vector<1x256x128xf32>,
    return
  }
  func.func @transform_0(%arg0: i32) -> (i32, i32, i32) {
    %c0_i32 = arith.constant 0 : i32
    %c0_i32_0 = arith.constant 0 : i32
    %c0_i32_1 = arith.constant 0 : i32
    return %arg0, %c0_i32, %c0_i32_0 : i32, i32, i32
  }
  func.func @transform_1(%arg0: i32) -> (i32, i32) {
    %c0_i32 = arith.constant 0 : i32
    %c0_i32_0 = arith.constant 0 : i32
    %c0_i32_1 = arith.constant 0 : i32
    return %c0_i32, %c0_i32_0 : i32, i32
  }
  func.func @transform_2(%arg0: i32) -> (i32, i32) {
    %c0_i32 = arith.constant 0 : i32
    %c0_i32_0 = arith.constant 0 : i32
    %c0_i32_1 = arith.constant 0 : i32
    return %c0_i32, %c0_i32_0 : i32, i32
  }
  func.func @transform_3(%arg0: i32) -> (i32, i32, i32) {
    %c0_i32 = arith.constant 0 : i32
    %c0_i32_0 = arith.constant 0 : i32
    %c0_i32_1 = arith.constant 0 : i32
    return %arg0, %c0_i32, %c0_i32_0 : i32, i32, i32
  }
}

</mosaic_0001>

<llo_original>
// kernel: conv_block.3
$region0: #{conv_block.3}
  #allocation0 [shape = 'u32[]', space=smem, size = 0x4, offset = 0x4, fixed_abs, tag = 'smem constant byte address 0x4 - core index']
  #allocation1 [shape = 'u32[144,128]{1,0:T(1,128)}', space=vmem, size = 0x12000, scoped, tag = 'internal scratch']
  %s0 = inlined_call_operand.vmem [shape: f32[2,256,128], index: 0, kind: input, shape index: {}]
  %s1 = inlined_call_operand.vmem [shape: f32[1,128], index: 1, kind: input, shape index: {}]
  %s2 = inlined_call_operand.vmem [shape: f32[1,128], index: 2, kind: input, shape index: {}]
  %s3 = inlined_call_operand.vmem [shape: f32[2,256,128], index: 3, kind: output, shape index: {}]
  %s4 = sld [smem:[#allocation0]]
  $region45: #{conv_block.3} parent=0
    _
  %s6 = ssub.s32 1, %s4
  %s7 = scalar_select 0, %s6, %s4
  loop: start=0, step=1, limit=4
  $region2: #{conv_block.3} parent=0 // loop_pre_header
    _
  $region3: #{conv_block.3} parent=0 // loop_header
    %s9 = sphi 0, %s13
    %p10 = scmp.ge.s32.totalorder %s9, 4
    %s19 = sphi 0, %s21
    %s22 = sphi 0, %s19
    %s23 = sphi 0, %s22
    %s39 = sphi 0, %s23
    %s43 = sphi 0, %s43
    %s45 = sphi 0, %s43
    %s46 = sphi 0, %s45
    %s60 = sphi 0, %s46
    %s64 = sphi 0, %s64
    %s66 = sphi 0, %s64
    %s67 = sphi 0, %s66
    %s81 = sphi 0, %s67
    %s87 = sphi 0, %s89
    %s90 = sphi 0, %s87
    %s91 = sphi 0, %s90
    %s107 = sphi 0, %s91
  $region4: #{conv_block.3} parent=0 // loop_header_branch
    %12 = sbr.rel (%p10) target = $region8
  $region5: #{conv_block.3} parent=0 // loop_body
    %s14 = ssub.s32 %s9, 1
    %s15 = ssub.s32 %s9, 2
    %s16 = sadd.s32 %s9, 1
    %s17 = ssub.s32 %s9, %s16
    %p18 = scmp.eq.s32.totalorder %s17, 0
    %s20 = sadd.s32 %s19, 1
    %s21 = scalar_select %p18, %s19, %s20
    %p24 = pneg %p18
    %p25 = scmp.eq.s32.totalorder %s9, 1
    %p26 = por %p24, %p25
    %p27 = scmp.ne.s32.totalorder %s19, %s22
    %p28 = scmp.eq.s32.totalorder %s9, 0
    %p29 = por %p27, %p28
    %p30 = scmp.ne.s32.totalorder %s19, %s22
    %p31 = scmp.eq.s32.totalorder %s14, 1
    %p32 = por %p30, %p31
    %p33 = scmp.ne.s32.totalorder %s22, %s23
    %p34 = scmp.eq.s32.totalorder %s14, 0
    %p35 = por %p33, %p34
    %p36 = scmp.ne.s32.totalorder %s22, %s23
    %p37 = scmp.eq.s32.totalorder %s15, 1
    %p38 = por %p36, %p37
    %p40 = scmp.ne.s32.totalorder %s23, %s39
    %p41 = scmp.eq.s32.totalorder %s15, 0
    %p42 = por %p40, %p41
    %s44 = sadd.s32 %s43, 1
    %p47 = scmp.eq.s32.totalorder %s9, 1
    %p48 = scmp.ne.s32.totalorder %s43, %s45
    %p49 = scmp.eq.s32.totalorder %s9, 0
    %p50 = por %p48, %p49
    %p51 = scmp.ne.s32.totalorder %s43, %s45
    %p52 = scmp.eq.s32.totalorder %s14, 1
    %p53 = por %p51, %p52
    %p54 = scmp.ne.s32.totalorder %s45, %s46
    %p55 = scmp.eq.s32.totalorder %s14, 0
    %p56 = por %p54, %p55
    %p57 = scmp.ne.s32.totalorder %s45, %s46
    %p58 = scmp.eq.s32.totalorder %s15, 1
    %p59 = por %p57, %p58
    %p61 = scmp.ne.s32.totalorder %s46, %s60
    %p62 = scmp.eq.s32.totalorder %s15, 0
    %p63 = por %p61, %p62
    %s65 = sadd.s32 %s64, 1
    %p68 = scmp.eq.s32.totalorder %s9, 1
    %p69 = scmp.ne.s32.totalorder %s64, %s66
    %p70 = scmp.eq.s32.totalorder %s9, 0
    %p71 = por %p69, %p70
    %p72 = scmp.ne.s32.totalorder %s64, %s66
    %p73 = scmp.eq.s32.totalorder %s14, 1
    %p74 = por %p72, %p73
    %p75 = scmp.ne.s32.totalorder %s66, %s67
    %p76 = scmp.eq.s32.totalorder %s14, 0
    %p77 = por %p75, %p76
    %p78 = scmp.ne.s32.totalorder %s66, %s67
    %p79 = scmp.eq.s32.totalorder %s15, 1
    %p80 = por %p78, %p79
    %p82 = scmp.ne.s32.totalorder %s67, %s81
    %p83 = scmp.eq.s32.totalorder %s15, 0
    %p84 = por %p82, %p83
    %s85 = ssub.s32 %s9, %s16
    %p86 = scmp.eq.s32.totalorder %s85, 0
    %s88 = sadd.s32 %s87, 1
    %s89 = scalar_select %p86, %s87, %s88
    %p92 = pneg %p86
    %p93 = scmp.eq.s32.totalorder %s9, 1
    %p94 = por %p92, %p93
    %p95 = scmp.ne.s32.totalorder %s87, %s90
    %p96 = scmp.eq.s32.totalorder %s9, 0
    %p97 = por %p95, %p96
    %p98 = scmp.ne.s32.totalorder %s87, %s90
    %p99 = scmp.eq.s32.totalorder %s14, 1
    %p100 = por %p98, %p99
    %p101 = scmp.ne.s32.totalorder %s90, %s91
    %p102 = scmp.eq.s32.totalorder %s14, 0
    %p103 = por %p101, %p102
    %p104 = scmp.ne.s32.totalorder %s90, %s91
    %p105 = scmp.eq.s32.totalorder %s15, 1
    %p106 = por %p104, %p105
    %p108 = scmp.ne.s32.totalorder %s91, %s107
    %p109 = scmp.eq.s32.totalorder %s15, 0
    %p110 = por %p108, %p109
    %p111 = scmp.le.s32.totalorder 1, %s9
    %p112 = scmp.lt.s32.totalorder %s9, 3
    %p113 = pnand %p111, %p112
    %p114 = pneg %p113
    // Predicated region
    $region9: #{conv_block.3} parent=5 // pred_check
      _
    $region10: #{conv_block.3} parent=5 // pred_check_branch
      %116 = sbr.rel (%p113) target = $region12
    $region11: #{conv_block.3} parent=5 // pred_region
      %s117 = ssub.s32 %s9, 1
      // Predicated region
      $region13: #{conv_block.3} parent=11 // pred_check
        %p118 = pneg %p56
      $region14: #{conv_block.3} parent=11 // pred_check_branch
        %120 = sbr.rel (%p118) target = $region16
      $region15: #{conv_block.3} parent=11 // pred_region
        _
      $region16: #{conv_block.3} parent=11 // pred_fallthru
        _
      // Predicated region
      $region17: #{conv_block.3} parent=11 // pred_check
        %p121 = pneg %p77
      $region18: #{conv_block.3} parent=11 // pred_check_branch
        %123 = sbr.rel (%p121) target = $region20
      $region19: #{conv_block.3} parent=11 // pred_region
        _
      $region20: #{conv_block.3} parent=11 // pred_fallthru
        _
    $region12: #{conv_block.3} parent=5 // pred_fallthru
      _
    %p124 = scmp.lt.s32.totalorder %s9, 2
    // Predicated region
    $region21: #{conv_block.3} parent=5 // pred_check
      %p125 = pneg %p124
    $region22: #{conv_block.3} parent=5 // pred_check_branch
      %127 = sbr.rel (%p125) target = $region24
    $region23: #{conv_block.3} parent=5 // pred_region
      // Predicated region
      $region25: #{conv_block.3} parent=23 // pred_check
        %p128 = pneg %p29
      $region26: #{conv_block.3} parent=23 // pred_check_branch
        %130 = sbr.rel (%p128) target = $region28
      $region27: #{conv_block.3} parent=23 // pred_region
        %p131 = scmp.lt.s32.totalorder %s9, 1
        %s132 = scalar_select %p131, %s9, 1
        %s133 = smul.addr %s132, 32
        %s134 = smul.addr %s133, 8
        %s135 = scalar_lea.vmem %s0, %s134
      $region28: #{conv_block.3} parent=23 // pred_fallthru
        _
    $region24: #{conv_block.3} parent=5 // pred_fallthru
      _
    %p136 = scmp.le.s32.totalorder 1, %s9
    %p137 = scmp.lt.s32.totalorder %s9, 3
    %p138 = pnand %p136, %p137
    %p139 = pneg %p138
    // Predicated region
    $region29: #{conv_block.3} parent=5 // pred_check
      _
    $region30: #{conv_block.3} parent=5 // pred_check_branch
      %141 = sbr.rel (%p138) target = $region32
    $region31: #{conv_block.3} parent=5 // pred_region
      %s142 = ssub.s32 %s9, 1
      %p143 = scmp.lt.s32.totalorder %s14, 1
      %s144 = scalar_select %p143, %s14, 1
      %s145 = smul.addr %s144, 32
      %s146 = smul.addr %s145, 8
      %s147 = scalar_lea.vmem %s0, %s146
      %p148 = pneg %p35
      %p149 = pneg %p32
      %p150 = pneg %p56
      %p151 = pneg %p53
      %p152 = pneg %p77
      %p153 = pneg %p74
      %p154 = pneg %p103
      %p155 = pneg %p100
      %p156 = scmp.lt.s32.totalorder %s14, 1
      %s157 = scalar_select %p156, %s14, 1
      %s158 = smul.addr %s157, 32
      %s159 = smul.addr %s158, 8
      %s160 = scalar_lea.vmem %s3, %s159
      %p161 = scmp.lt.s32.totalorder %s14, 1
      %s162 = scalar_select %p161, %s14, 1
      %s163 = smul.addr %s162, 32
      %s164 = smul.addr %s163, 8
      %s165 = scalar_lea.vmem %s0, %s164
      %p166 = scmp.lt.s32.totalorder %s14, 1
      %s167 = scalar_select %p166, %s14, 1
      %s168 = smul.addr %s167, 32
      %s169 = smul.addr %s168, 8
      %s170 = scalar_lea.vmem %s3, %s169
      %v171 = vld [vmem:[%s165] sm:$0xff]
      %v172 = vld [vmem:[%s165 + $0x8] sm:$0xff]
      %v173 = vld [vmem:[%s165 + $0x10] sm:$0xff]
      %v174 = vld [vmem:[%s165 + $0x18] sm:$0xff]
      %v175 = vld [vmem:[%s165 + $0x20] sm:$0xff]
      %v176 = vld [vmem:[%s165 + $0x28] sm:$0xff]
      %v177 = vld [vmem:[%s165 + $0x30] sm:$0xff]
      %v178 = vld [vmem:[%s165 + $0x38] sm:$0xff]
      %v179 = vld [vmem:[%s165 + $0x40] sm:$0xff]
      %v180 = vld [vmem:[%s165 + $0x48] sm:$0xff]
      %v181 = vld [vmem:[%s165 + $0x50] sm:$0xff]
      %v182 = vld [vmem:[%s165 + $0x58] sm:$0xff]
      %v183 = vld [vmem:[%s165 + $0x60] sm:$0xff]
      %v184 = vld [vmem:[%s165 + $0x68] sm:$0xff]
      %v185 = vld [vmem:[%s165 + $0x70] sm:$0xff]
      %v186 = vld [vmem:[%s165 + $0x78] sm:$0xff]
      %v187 = vld [vmem:[%s165 + $0x80] sm:$0xff]
      %v188 = vld [vmem:[%s165 + $0x88] sm:$0xff]
      %v189 = vld [vmem:[%s165 + $0x90] sm:$0xff]
      %v190 = vld [vmem:[%s165 + $0x98] sm:$0xff]
      %v191 = vld [vmem:[%s165 + $0xa0] sm:$0xff]
      %v192 = vld [vmem:[%s165 + $0xa8] sm:$0xff]
      %v193 = vld [vmem:[%s165 + $0xb0] sm:$0xff]
      %v194 = vld [vmem:[%s165 + $0xb8] sm:$0xff]
      %v195 = vld [vmem:[%s165 + $0xc0] sm:$0xff]
      %v196 = vld [vmem:[%s165 + $0xc8] sm:$0xff]
      %v197 = vld [vmem:[%s165 + $0xd0] sm:$0xff]
      %v198 = vld [vmem:[%s165 + $0xd8] sm:$0xff]
      %v199 = vld [vmem:[%s165 + $0xe0] sm:$0xff]
      %v200 = vld [vmem:[%s165 + $0xe8] sm:$0xff]
      %v201 = vld [vmem:[%s165 + $0xf0] sm:$0xff]
      %v202 = vld [vmem:[%s165 + $0xf8] sm:$0xff]
      %v203 = vld [vmem:[%s1] sm:$0x1]
      %v205 = vlaneseq
      %v206 = vshrl.u32 %v205, 7
      %v207 = vsub.s32 0, %v206
      %v208 = vrot.slane %v203, %v207
      %v210 = vmul.f32 %v171, %v208
      %v211 = vmul.f32 %v172, %v208
      %v212 = vmul.f32 %v173, %v208
      %v213 = vmul.f32 %v174, %v208
      %v214 = vmul.f32 %v175, %v208
      %v215 = vmul.f32 %v176, %v208
      %v216 = vmul.f32 %v177, %v208
      %v217 = vmul.f32 %v178, %v208
      %v218 = vmul.f32 %v179, %v208
      %v219 = vmul.f32 %v180, %v208
      %v220 = vmul.f32 %v181, %v208
      %v221 = vmul.f32 %v182, %v208
      %v222 = vmul.f32 %v183, %v208
      %v223 = vmul.f32 %v184, %v208
      %v224 = vmul.f32 %v185, %v208
      %v225 = vmul.f32 %v186, %v208
      %v226 = vmul.f32 %v187, %v208
      %v227 = vmul.f32 %v188, %v208
      %v228 = vmul.f32 %v189, %v208
      %v229 = vmul.f32 %v190, %v208
      %v230 = vmul.f32 %v191, %v208
      %v231 = vmul.f32 %v192, %v208
      %v232 = vmul.f32 %v193, %v208
      %v233 = vmul.f32 %v194, %v208
      %v234 = vmul.f32 %v195, %v208
      %v235 = vmul.f32 %v196, %v208
      %v236 = vmul.f32 %v197, %v208
      %v237 = vmul.f32 %v198, %v208
      %v238 = vmul.f32 %v199, %v208
      %v239 = vmul.f32 %v200, %v208
      %v240 = vmul.f32 %v201, %v208
      %v241 = vmul.f32 %v202, %v208
      %v242 = vld [vmem:[%s2] sm:$0x1]
      %v244 = vlaneseq
      %v245 = vshrl.u32 %v244, 7
      %v246 = vsub.s32 0, %v245
      %v247 = vrot.slane %v242, %v246
      %v249 = vadd.f32 %v210, %v247
      %v250 = vadd.f32 %v211, %v247
      %v251 = vadd.f32 %v212, %v247
      %v252 = vadd.f32 %v213, %v247
      %v253 = vadd.f32 %v214, %v247
      %v254 = vadd.f32 %v215, %v247
      %v255 = vadd.f32 %v216, %v247
      %v256 = vadd.f32 %v217, %v247
      %v257 = vadd.f32 %v218, %v247
      %v258 = vadd.f32 %v219, %v247
      %v259 = vadd.f32 %v220, %v247
      %v260 = vadd.f32 %v221, %v247
      %v261 = vadd.f32 %v222, %v247
      %v262 = vadd.f32 %v223, %v247
      %v263 = vadd.f32 %v224, %v247
      %v264 = vadd.f32 %v225, %v247
      %v265 = vadd.f32 %v226, %v247
      %v266 = vadd.f32 %v227, %v247
      %v267 = vadd.f32 %v228, %v247
      %v268 = vadd.f32 %v229, %v247
      %v269 = vadd.f32 %v230, %v247
      %v270 = vadd.f32 %v231, %v247
      %v271 = vadd.f32 %v232, %v247
      %v272 = vadd.f32 %v233, %v247
      %v273 = vadd.f32 %v234, %v247
      %v274 = vadd.f32 %v235, %v247
      %v275 = vadd.f32 %v236, %v247
      %v276 = vadd.f32 %v237, %v247
      %v277 = vadd.f32 %v238, %v247
      %v278 = vadd.f32 %v239, %v247
      %v279 = vadd.f32 %v240, %v247
      %v280 = vadd.f32 %v241, %v247
      %v281 = vmax.f32 %v249, 0.0
      %v282 = vmax.f32 %v250, 0.0
      %v283 = vmax.f32 %v251, 0.0
      %v284 = vmax.f32 %v252, 0.0
      %v285 = vmax.f32 %v253, 0.0
      %v286 = vmax.f32 %v254, 0.0
      %v287 = vmax.f32 %v255, 0.0
      %v288 = vmax.f32 %v256, 0.0
      %v289 = vmax.f32 %v257, 0.0
      %v290 = vmax.f32 %v258, 0.0
      %v291 = vmax.f32 %v259, 0.0
      %v292 = vmax.f32 %v260, 0.0
      %v293 = vmax.f32 %v261, 0.0
      %v294 = vmax.f32 %v262, 0.0
      %v295 = vmax.f32 %v263, 0.0
      %v296 = vmax.f32 %v264, 0.0
      %v297 = vmax.f32 %v265, 0.0
      %v298 = vmax.f32 %v266, 0.0
      %v299 = vmax.f32 %v267, 0.0
      %v300 = vmax.f32 %v268, 0.0
      %v301 = vmax.f32 %v269, 0.0
      %v302 = vmax.f32 %v270, 0.0
      %v303 = vmax.f32 %v271, 0.0
      %v304 = vmax.f32 %v272, 0.0
      %v305 = vmax.f32 %v273, 0.0
      %v306 = vmax.f32 %v274, 0.0
      %v307 = vmax.f32 %v275, 0.0
      %v308 = vmax.f32 %v276, 0.0
      %v309 = vmax.f32 %v277, 0.0
      %v310 = vmax.f32 %v278, 0.0
      %v311 = vmax.f32 %v279, 0.0
      %v312 = vmax.f32 %v280, 0.0
      %313 = vst [vmem:[%s170] sm:$0xff] %v281
      %314 = vst [vmem:[%s170 + $0x8] sm:$0xff] %v282
      %315 = vst [vmem:[%s170 + $0x10] sm:$0xff] %v283
      %316 = vst [vmem:[%s170 + $0x18] sm:$0xff] %v284
      %317 = vst [vmem:[%s170 + $0x20] sm:$0xff] %v285
      %318 = vst [vmem:[%s170 + $0x28] sm:$0xff] %v286
      %319 = vst [vmem:[%s170 + $0x30] sm:$0xff] %v287
      %320 = vst [vmem:[%s170 + $0x38] sm:$0xff] %v288
      %321 = vst [vmem:[%s170 + $0x40] sm:$0xff] %v289
      %322 = vst [vmem:[%s170 + $0x48] sm:$0xff] %v290
      %323 = vst [vmem:[%s170 + $0x50] sm:$0xff] %v291
      %324 = vst [vmem:[%s170 + $0x58] sm:$0xff] %v292
      %325 = vst [vmem:[%s170 + $0x60] sm:$0xff] %v293
      %326 = vst [vmem:[%s170 + $0x68] sm:$0xff] %v294
      %327 = vst [vmem:[%s170 + $0x70] sm:$0xff] %v295
      %328 = vst [vmem:[%s170 + $0x78] sm:$0xff] %v296
      %329 = vst [vmem:[%s170 + $0x80] sm:$0xff] %v297
      %330 = vst [vmem:[%s170 + $0x88] sm:$0xff] %v298
      %331 = vst [vmem:[%s170 + $0x90] sm:$0xff] %v299
      %332 = vst [vmem:[%s170 + $0x98] sm:$0xff] %v300
      %333 = vst [vmem:[%s170 + $0xa0] sm:$0xff] %v301
      %334 = vst [vmem:[%s170 + $0xa8] sm:$0xff] %v302
      %335 = vst [vmem:[%s170 + $0xb0] sm:$0xff] %v303
      %336 = vst [vmem:[%s170 + $0xb8] sm:$0xff] %v304
      %337 = vst [vmem:[%s170 + $0xc0] sm:$0xff] %v305
      %338 = vst [vmem:[%s170 + $0xc8] sm:$0xff] %v306
      %339 = vst [vmem:[%s170 + $0xd0] sm:$0xff] %v307
      %340 = vst [vmem:[%s170 + $0xd8] sm:$0xff] %v308
      %341 = vst [vmem:[%s170 + $0xe0] sm:$0xff] %v309
      %342 = vst [vmem:[%s170 + $0xe8] sm:$0xff] %v310
      %343 = vst [vmem:[%s170 + $0xf0] sm:$0xff] %v311
      %344 = vst [vmem:[%s170 + $0xf8] sm:$0xff] %v312
      %p345 = scmp.lt.s32.totalorder %s14, 1
      %s346 = scalar_select %p345, %s14, 1
      %s347 = smul.addr %s346, 32
      %s348 = smul.addr %s347, 8
      %s349 = scalar_lea.vmem %s3, %s348
      // Predicated region
      $region33: #{conv_block.3} parent=31 // pred_check
        %p350 = pneg %p100
      $region34: #{conv_block.3} parent=31 // pred_check_branch
        %352 = sbr.rel (%p350) target = $region36
      $region35: #{conv_block.3} parent=31 // pred_region
        _
      $region36: #{conv_block.3} parent=31 // pred_fallthru
        _
    $region32: #{conv_block.3} parent=5 // pred_fallthru
      _
    %p353 = scmp.le.s32.totalorder 2, %s9
    // Predicated region
    $region37: #{conv_block.3} parent=5 // pred_check
      %p354 = pneg %p353
    $region38: #{conv_block.3} parent=5 // pred_check_branch
      %356 = sbr.rel (%p354) target = $region40
    $region39: #{conv_block.3} parent=5 // pred_region
      %s357 = ssub.s32 %s9, 2
      // Predicated region
      $region41: #{conv_block.3} parent=39 // pred_check
        %p358 = pneg %p106
      $region42: #{conv_block.3} parent=39 // pred_check_branch
        %360 = sbr.rel (%p358) target = $region44
      $region43: #{conv_block.3} parent=39 // pred_region
        %p361 = scmp.lt.s32.totalorder %s15, 1
        %s362 = scalar_select %p361, %s15, 1
        %s363 = smul.addr %s362, 32
        %s364 = smul.addr %s363, 8
        %s365 = scalar_lea.vmem %s3, %s364
      $region44: #{conv_block.3} parent=39 // pred_fallthru
        _
    $region40: #{conv_block.3} parent=5 // pred_fallthru
      _
  $region6: #{conv_block.3} parent=0 // loop_footer
    %s13 = sadd.s32 1, %s9
  $region7: #{conv_block.3} parent=0 // loop_footer_branch
    %8 = sbr.rel target = $region3
  $region8: #{conv_block.3} parent=0 // loop_exit
    _

// kernel: conv_block.2
$region0: #{conv_block.2}
  #allocation0 [shape = 'u32[]', space=smem, size = 0x4, offset = 0x4, fixed_abs, tag = 'smem constant byte address 0x4 - core index']
  #allocation1 [shape = 'u32[144,128]{1,0:T(1,128)}', space=vmem, size = 0x12000, scoped, tag = 'internal scratch']
  %s0 = inlined_call_operand.vmem [shape: f32[2,18,18,4], index: 0, kind: input, shape index: {}]
  %s1 = inlined_call_operand.vmem [shape: f32[36,128], index: 1, kind: input, shape index: {}]
  %s2 = inlined_call_operand.vmem [shape: f32[2,256,128], index: 2, kind: output, shape index: {0}]
  %s3 = inlined_call_operand.vmem [shape: f32[2,1,128], index: 3, kind: output, shape index: {1}]
  %s4 = inlined_call_operand.vmem [shape: f32[2,1,128], index: 4, kind: output, shape index: {2}]
  %5 = xla_tuple %s2, %s3, %s4
  %s6 = sld [smem:[#allocation0]]
  $region57: #{conv_block.2} parent=0
    _
  %s8 = ssub.s32 1, %s6
  %s9 = scalar_select 0, %s8, %s6
  loop: start=0, step=1, limit=4
  $region2: #{conv_block.2} parent=0 // loop_pre_header
    _
  $region3: #{conv_block.2} parent=0 // loop_header
    %s11 = sphi 0, %s15
    %p12 = scmp.ge.s32.totalorder %s11, 4
    %s21 = sphi 0, %s23
    %s24 = sphi 0, %s21
    %s25 = sphi 0, %s24
    %s41 = sphi 0, %s25
    %s45 = sphi 0, %s45
    %s47 = sphi 0, %s45
    %s48 = sphi 0, %s47
    %s62 = sphi 0, %s48
    %s68 = sphi 0, %s70
    %s71 = sphi 0, %s68
    %s72 = sphi 0, %s71
    %s88 = sphi 0, %s72
    %s94 = sphi 0, %s96
    %s97 = sphi 0, %s94
    %s98 = sphi 0, %s97
    %s114 = sphi 0, %s98
    %s120 = sphi 0, %s122
    %s123 = sphi 0, %s120
    %s124 = sphi 0, %s123
    %s140 = sphi 0, %s124
  $region4: #{conv_block.2} parent=0 // loop_header_branch
    %14 = sbr.rel (%p12) target = $region8
  $region5: #{conv_block.2} parent=0 // loop_body
    %s16 = ssub.s32 %s11, 1
    %s17 = ssub.s32 %s11, 2
    %s18 = sadd.s32 %s11, 1
    %s19 = ssub.s32 %s11, %s18
    %p20 = scmp.eq.s32.totalorder %s19, 0
    %s22 = sadd.s32 %s21, 1
    %s23 = scalar_select %p20, %s21, %s22
    %p26 = pneg %p20
    %p27 = scmp.eq.s32.totalorder %s11, 1
    %p28 = por %p26, %p27
    %p29 = scmp.ne.s32.totalorder %s21, %s24
    %p30 = scmp.eq.s32.totalorder %s11, 0
    %p31 = por %p29, %p30
    %p32 = scmp.ne.s32.totalorder %s21, %s24
    %p33 = scmp.eq.s32.totalorder %s16, 1
    %p34 = por %p32, %p33
    %p35 = scmp.ne.s32.totalorder %s24, %s25
    %p36 = scmp.eq.s32.totalorder %s16, 0
    %p37 = por %p35, %p36
    %p38 = scmp.ne.s32.totalorder %s24, %s25
    %p39 = scmp.eq.s32.totalorder %s17, 1
    %p40 = por %p38, %p39
    %p42 = scmp.ne.s32.totalorder %s25, %s41
    %p43 = scmp.eq.s32.totalorder %s17, 0
    %p44 = por %p42, %p43
    %s46 = sadd.s32 %s45, 1
    %p49 = scmp.eq.s32.totalorder %s11, 1
    %p50 = scmp.ne.s32.totalorder %s45, %s47
    %p51 = scmp.eq.s32.totalorder %s11, 0
    %p52 = por %p50, %p51
    %p53 = scmp.ne.s32.totalorder %s45, %s47
    %p54 = scmp.eq.s32.totalorder %s16, 1
    %p55 = por %p53, %p54
    %p56 = scmp.ne.s32.totalorder %s47, %s48
    %p57 = scmp.eq.s32.totalorder %s16, 0
    %p58 = por %p56, %p57
    %p59 = scmp.ne.s32.totalorder %s47, %s48
    %p60 = scmp.eq.s32.totalorder %s17, 1
    %p61 = por %p59, %p60
    %p63 = scmp.ne.s32.totalorder %s48, %s62
    %p64 = scmp.eq.s32.totalorder %s17, 0
    %p65 = por %p63, %p64
    %s66 = ssub.s32 %s11, %s18
    %p67 = scmp.eq.s32.totalorder %s66, 0
    %s69 = sadd.s32 %s68, 1
    %s70 = scalar_select %p67, %s68, %s69
    %p73 = pneg %p67
    %p74 = scmp.eq.s32.totalorder %s11, 1
    %p75 = por %p73, %p74
    %p76 = scmp.ne.s32.totalorder %s68, %s71
    %p77 = scmp.eq.s32.totalorder %s11, 0
    %p78 = por %p76, %p77
    %p79 = scmp.ne.s32.totalorder %s68, %s71
    %p80 = scmp.eq.s32.totalorder %s16, 1
    %p81 = por %p79, %p80
    %p82 = scmp.ne.s32.totalorder %s71, %s72
    %p83 = scmp.eq.s32.totalorder %s16, 0
    %p84 = por %p82, %p83
    %p85 = scmp.ne.s32.totalorder %s71, %s72
    %p86 = scmp.eq.s32.totalorder %s17, 1
    %p87 = por %p85, %p86
    %p89 = scmp.ne.s32.totalorder %s72, %s88
    %p90 = scmp.eq.s32.totalorder %s17, 0
    %p91 = por %p89, %p90
    %s92 = ssub.s32 %s11, %s18
    %p93 = scmp.eq.s32.totalorder %s92, 0
    %s95 = sadd.s32 %s94, 1
    %s96 = scalar_select %p93, %s94, %s95
    %p99 = pneg %p93
    %p100 = scmp.eq.s32.totalorder %s11, 1
    %p101 = por %p99, %p100
    %p102 = scmp.ne.s32.totalorder %s94, %s97
    %p103 = scmp.eq.s32.totalorder %s11, 0
    %p104 = por %p102, %p103
    %p105 = scmp.ne.s32.totalorder %s94, %s97
    %p106 = scmp.eq.s32.totalorder %s16, 1
    %p107 = por %p105, %p106
    %p108 = scmp.ne.s32.totalorder %s97, %s98
    %p109 = scmp.eq.s32.totalorder %s16, 0
    %p110 = por %p108, %p109
    %p111 = scmp.ne.s32.totalorder %s97, %s98
    %p112 = scmp.eq.s32.totalorder %s17, 1
    %p113 = por %p111, %p112
    %p115 = scmp.ne.s32.totalorder %s98, %s114
    %p116 = scmp.eq.s32.totalorder %s17, 0
    %p117 = por %p115, %p116
    %s118 = ssub.s32 %s11, %s18
    %p119 = scmp.eq.s32.totalorder %s118, 0
    %s121 = sadd.s32 %s120, 1
    %s122 = scalar_select %p119, %s120, %s121
    %p125 = pneg %p119
    %p126 = scmp.eq.s32.totalorder %s11, 1
    %p127 = por %p125, %p126
    %p128 = scmp.ne.s32.totalorder %s120, %s123
    %p129 = scmp.eq.s32.totalorder %s11, 0
    %p130 = por %p128, %p129
    %p131 = scmp.ne.s32.totalorder %s120, %s123
    %p132 = scmp.eq.s32.totalorder %s16, 1
    %p133 = por %p131, %p132
    %p134 = scmp.ne.s32.totalorder %s123, %s124
    %p135 = scmp.eq.s32.totalorder %s16, 0
    %p136 = por %p134, %p135
    %p137 = scmp.ne.s32.totalorder %s123, %s124
    %p138 = scmp.eq.s32.totalorder %s17, 1
    %p139 = por %p137, %p138
    %p141 = scmp.ne.s32.totalorder %s124, %s140
    %p142 = scmp.eq.s32.totalorder %s17, 0
    %p143 = por %p141, %p142
    %p144 = scmp.le.s32.totalorder 1, %s11
    %p145 = scmp.lt.s32.totalorder %s11, 3
    %p146 = pnand %p144, %p145
    %p147 = pneg %p146
    // Predicated region
    $region9: #{conv_block.2} parent=5 // pred_check
      _
    $region10: #{conv_block.2} parent=5 // pred_check_branch
      %149 = sbr.rel (%p146) target = $region12
    $region11: #{conv_block.2} parent=5 // pred_region
      %s150 = ssub.s32 %s11, 1
      // Predicated region
      $region13: #{conv_block.2} parent=11 // pred_check
        %p151 = pneg %p58
      $region14: #{conv_block.2} parent=11 // pred_check_branch
        %153 = sbr.rel (%p151) target = $region16
      $region15: #{conv_block.2} parent=11 // pred_region
        _
      $region16: #{conv_block.2} parent=11 // pred_fallthru
        _
    $region12: #{conv_block.2} parent=5 // pred_fallthru
      _
    %p154 = scmp.lt.s32.totalorder %s11, 2
    // Predicated region
    $region17: #{conv_block.2} parent=5 // pred_check
      %p155 = pneg %p154
    $region18: #{conv_block.2} parent=5 // pred_check_branch
      %157 = sbr.rel (%p155) target = $region20
    $region19: #{conv_block.2} parent=5 // pred_region
      // Predicated region
      $region21: #{conv_block.2} parent=19 // pred_check
        %p158 = pneg %p31
      $region22: #{conv_block.2} parent=19 // pred_check_branch
        %160 = sbr.rel (%p158) target = $region24
      $region23: #{conv_block.2} parent=19 // pred_region
        %p161 = scmp.lt.s32.totalorder %s11, 1
        %s162 = scalar_select %p161, %s11, 1
        %s163 = smul.addr %s162, 54
        %s164 = smul.addr %s163, 8
        %s165 = scalar_lea.vmem %s0, %s164
      $region24: #{conv_block.2} parent=19 // pred_fallthru
        _
    $region20: #{conv_block.2} parent=5 // pred_fallthru
      _
    %p166 = scmp.le.s32.totalorder 1, %s11
    %p167 = scmp.lt.s32.totalorder %s11, 3
    %p168 = pnand %p166, %p167
    %p169 = pneg %p168
    // Predicated region
    $region25: #{conv_block.2} parent=5 // pred_check
      _
    $region26: #{conv_block.2} parent=5 // pred_check_branch
      %171 = sbr.rel (%p168) target = $region28
    $region27: #{conv_block.2} parent=5 // pred_region
      %s172 = ssub.s32 %s11, 1
      %p173 = scmp.lt.s32.totalorder %s16, 1
      %s174 = scalar_select %p173, %s16, 1
      %s175 = smul.addr %s174, 54
      %s176 = smul.addr %s175, 8
      %s177 = scalar_lea.vmem %s0, %s176
      %p178 = pneg %p37
      %p179 = pneg %p34
      %p180 = pneg %p58
      %p181 = pneg %p55
      %p182 = pneg %p84
      %p183 = pneg %p81
      %p184 = scmp.lt.s32.totalorder %s16, 1
      %s185 = scalar_select %p184, %s16, 1
      %s186 = smul.addr %s185, 32
      %s187 = smul.addr %s186, 8
      %s188 = scalar_lea.vmem %s2, %s187
      %p189 = pneg %p110
      %p190 = pneg %p107
      %p191 = scmp.lt.s32.totalorder %s16, 1
      %s192 = scalar_select %p191, %s16, 1
      %s193 = scalar_lea.vmem %s3, %s192
      %p194 = pneg %p136
      %p195 = pneg %p133
      %p196 = scmp.lt.s32.totalorder %s16, 1
      %s197 = scalar_select %p196, %s16, 1
      %s198 = scalar_lea.vmem %s4, %s197
      %p199 = scmp.lt.s32.totalorder %s16, 1
      %s200 = scalar_select %p199, %s16, 1
      %s201 = smul.addr %s200, 54
      %s202 = smul.addr %s201, 8
      %s203 = scalar_lea.vmem %s0, %s202
      %p204 = scmp.lt.s32.totalorder %s16, 1
      %s205 = scalar_select %p204, %s16, 1
      %s206 = smul.addr %s205, 32
      %s207 = smul.addr %s206, 8
      %s208 = scalar_lea.vmem %s2, %s207
      %p209 = scmp.lt.s32.totalorder %s16, 1
      %s210 = scalar_select %p209, %s16, 1
      %s211 = scalar_lea.vmem %s3, %s210
      %p212 = scmp.lt.s32.totalorder %s16, 1
      %s213 = scalar_select %p212, %s16, 1
      %s214 = scalar_lea.vmem %s4, %s213
      %v215 = vld [vmem:[%s203] sm:$0xff]
      %v216 = vld [vmem:[%s203 + $0x8] sm:$0xff]
      %v217 = vld [vmem:[%s203 + $0x18] sm:$0xff]
      %v218 = vld [vmem:[%s203 + $0x20] sm:$0xff]
      %v219 = vld [vmem:[%s203 + $0x30] sm:$0xff]
      %v220 = vld [vmem:[%s203 + $0x38] sm:$0xff]
      %v221 = vld [vmem:[%s203 + $0x48] sm:$0xff]
      %v222 = vld [vmem:[%s203 + $0x50] sm:$0xff]
      %v223 = vld [vmem:[%s203 + $0x60] sm:$0xff]
      %v224 = vld [vmem:[%s203 + $0x68] sm:$0xff]
      %v225 = vld [vmem:[%s203 + $0x78] sm:$0xff]
      %v226 = vld [vmem:[%s203 + $0x80] sm:$0xff]
      %v227 = vld [vmem:[%s203 + $0x90] sm:$0xff]
      %v228 = vld [vmem:[%s203 + $0x98] sm:$0xff]
      %v229 = vld [vmem:[%s203 + $0xa8] sm:$0xff]
      %v230 = vld [vmem:[%s203 + $0xb0] sm:$0xff]
      %v231 = vld [vmem:[%s203 + $0xc0] sm:$0xff]
      %v232 = vld [vmem:[%s203 + $0xc8] sm:$0xff]
      %v233 = vld [vmem:[%s203 + $0xd8] sm:$0xff]
      %v234 = vld [vmem:[%s203 + $0xe0] sm:$0xff]
      %v235 = vld [vmem:[%s203 + $0xf0] sm:$0xff]
      %v236 = vld [vmem:[%s203 + $0xf8] sm:$0xff]
      %v237 = vld [vmem:[%s203 + $0x108] sm:$0xff]
      %v238 = vld [vmem:[%s203 + $0x110] sm:$0xff]
      %v239 = vld [vmem:[%s203 + $0x120] sm:$0xff]
      %v240 = vld [vmem:[%s203 + $0x128] sm:$0xff]
      %v241 = vld [vmem:[%s203 + $0x138] sm:$0xff]
      %v242 = vld [vmem:[%s203 + $0x140] sm:$0xff]
      %v243 = vld [vmem:[%s203 + $0x150] sm:$0xff]
      %v244 = vld [vmem:[%s203 + $0x158] sm:$0xff]
      %v245 = vld [vmem:[%s203 + $0x168] sm:$0xff]
      %v246 = vld [vmem:[%s203 + $0x170] sm:$0xff]
      %v247 = vld [vmem:[%s203 + $0x1] sm:$0xff]
      %v248 = vld [vmem:[%s203 + $0x9] sm:$0xff]
      %v249 = vld [vmem:[%s203 + $0x19] sm:$0xff]
      %v250 = vld [vmem:[%s203 + $0x21] sm:$0xff]
      %v251 = vld [vmem:[%s203 + $0x31] sm:$0xff]
      %v252 = vld [vmem:[%s203 + $0x39] sm:$0xff]
      %v253 = vld [vmem:[%s203 + $0x49] sm:$0xff]
      %v254 = vld [vmem:[%s203 + $0x51] sm:$0xff]
      %v255 = vld [vmem:[%s203 + $0x61] sm:$0xff]
      %v256 = vld [vmem:[%s203 + $0x69] sm:$0xff]
      %v257 = vld [vmem:[%s203 + $0x79] sm:$0xff]
      %v258 = vld [vmem:[%s203 + $0x81] sm:$0xff]
      %v259 = vld [vmem:[%s203 + $0x91] sm:$0xff]
      %v260 = vld [vmem:[%s203 + $0x99] sm:$0xff]
      %v261 = vld [vmem:[%s203 + $0xa9] sm:$0xff]
      %v262 = vld [vmem:[%s203 + $0xb1] sm:$0xff]
      %v263 = vld [vmem:[%s203 + $0xc1] sm:$0xff]
      %v264 = vld [vmem:[%s203 + $0xc9] sm:$0xff]
      %v265 = vld [vmem:[%s203 + $0xd9] sm:$0xff]
      %v266 = vld [vmem:[%s203 + $0xe1] sm:$0xff]
      %v267 = vld [vmem:[%s203 + $0xf1] sm:$0xff]
      %v268 = vld [vmem:[%s203 + $0xf9] sm:$0xff]
      %v269 = vld [vmem:[%s203 + $0x109] sm:$0xff]
      %v270 = vld [vmem:[%s203 + $0x111] sm:$0xff]
      %v271 = vld [vmem:[%s203 + $0x121] sm:$0xff]
      %v272 = vld [vmem:[%s203 + $0x129] sm:$0xff]
      %v273 = vld [vmem:[%s203 + $0x139] sm:$0xff]
      %v274 = vld [vmem:[%s203 + $0x141] sm:$0xff]
      %v275 = vld [vmem:[%s203 + $0x151] sm:$0xff]
      %v276 = vld [vmem:[%s203 + $0x159] sm:$0xff]
      %v277 = vld [vmem:[%s203 + $0x169] sm:$0xff]
      %v278 = vld [vmem:[%s203 + $0x171] sm:$0xff]
      %v279 = vld [vmem:[%s203 + $0x2] sm:$0xff]
      %v280 = vld [vmem:[%s203 + $0xa] sm:$0xff]
      %v281 = vld [vmem:[%s203 + $0x1a] sm:$0xff]
      %v282 = vld [vmem:[%s203 + $0x22] sm:$0xff]
      %v283 = vld [vmem:[%s203 + $0x32] sm:$0xff]
      %v284 = vld [vmem:[%s203 + $0x3a] sm:$0xff]
      %v285 = vld [vmem:[%s203 + $0x4a] sm:$0xff]
      %v286 = vld [vmem:[%s203 + $0x52] sm:$0xff]
      %v287 = vld [vmem:[%s203 + $0x62] sm:$0xff]
      %v288 = vld [vmem:[%s203 + $0x6a] sm:$0xff]
      %v289 = vld [vmem:[%s203 + $0x7a] sm:$0xff]
      %v290 = vld [vmem:[%s203 + $0x82] sm:$0xff]
      %v291 = vld [vmem:[%s203 + $0x92] sm:$0xff]
      %v292 = vld [vmem:[%s203 + $0x9a] sm:$0xff]
      %v293 = vld [vmem:[%s203 + $0xaa] sm:$0xff]
      %v294 = vld [vmem:[%s203 + $0xb2] sm:$0xff]
      %v295 = vld [vmem:[%s203 + $0xc2] sm:$0xff]
      %v296 = vld [vmem:[%s203 + $0xca] sm:$0xff]
      %v297 = vld [vmem:[%s203 + $0xda] sm:$0xff]
      %v298 = vld [vmem:[%s203 + $0xe2] sm:$0xff]
      %v299 = vld [vmem:[%s203 + $0xf2] sm:$0xff]
      %v300 = vld [vmem:[%s203 + $0xfa] sm:$0xff]
      %v301 = vld [vmem:[%s203 + $0x10a] sm:$0xff]
      %v302 = vld [vmem:[%s203 + $0x112] sm:$0xff]
      %v303 = vld [vmem:[%s203 + $0x122] sm:$0xff]
      %v304 = vld [vmem:[%s203 + $0x12a] sm:$0xff]
      %v305 = vld [vmem:[%s203 + $0x13a] sm:$0xff]
      %v306 = vld [vmem:[%s203 + $0x142] sm:$0xff]
      %v307 = vld [vmem:[%s203 + $0x152] sm:$0xff]
      %v308 = vld [vmem:[%s203 + $0x15a] sm:$0xff]
      %v309 = vld [vmem:[%s203 + $0x16a] sm:$0xff]
      %v310 = vld [vmem:[%s203 + $0x172] sm:$0xff]
      %s311 = scalar_lea.vmem %s203, 24
      %v312 = vld [vmem:[%s311] sm:$0xff]
      %v313 = vld [vmem:[%s311 + $0x8] sm:$0xff]
      %v314 = vld [vmem:[%s311 + $0x18] sm:$0xff]
      %v315 = vld [vmem:[%s311 + $0x20] sm:$0xff]
      %v316 = vld [vmem:[%s311 + $0x30] sm:$0xff]
      %v317 = vld [vmem:[%s311 + $0x38] sm:$0xff]
      %v318 = vld [vmem:[%s311 + $0x48] sm:$0xff]
      %v319 = vld [vmem:[%s311 + $0x50] sm:$0xff]
      %v320 = vld [vmem:[%s311 + $0x60] sm:$0xff]
      %v321 = vld [vmem:[%s311 + $0x68] sm:$0xff]
      %v322 = vld [vmem:[%s311 + $0x78] sm:$0xff]
      %v323 = vld [vmem:[%s311 + $0x80] sm:$0xff]
      %v324 = vld [vmem:[%s311 + $0x90] sm:$0xff]
      %v325 = vld [vmem:[%s311 + $0x98] sm:$0xff]
      %v326 = vld [vmem:[%s311 + $0xa8] sm:$0xff]
      %v327 = vld [vmem:[%s311 + $0xb0] sm:$0xff]
      %v328 = vld [vmem:[%s311 + $0xc0] sm:$0xff]
      %v329 = vld [vmem:[%s311 + $0xc8] sm:$0xff]
      %v330 = vld [vmem:[%s311 + $0xd8] sm:$0xff]
      %v331 = vld [vmem:[%s311 + $0xe0] sm:$0xff]
      %v332 = vld [vmem:[%s311 + $0xf0] sm:$0xff]
      %v333 = vld [vmem:[%s311 + $0xf8] sm:$0xff]
      %v334 = vld [vmem:[%s311 + $0x108] sm:$0xff]
      %v335 = vld [vmem:[%s311 + $0x110] sm:$0xff]
      %v336 = vld [vmem:[%s311 + $0x120] sm:$0xff]
      %v337 = vld [vmem:[%s311 + $0x128] sm:$0xff]
      %v338 = vld [vmem:[%s311 + $0x138] sm:$0xff]
      %v339 = vld [vmem:[%s311 + $0x140] sm:$0xff]
      %v340 = vld [vmem:[%s311 + $0x150] sm:$0xff]
      %v341 = vld [vmem:[%s311 + $0x158] sm:$0xff]
      %v342 = vld [vmem:[%s311 + $0x168] sm:$0xff]
      %v343 = vld [vmem:[%s311 + $0x170] sm:$0xff]
      %v344 = vld [vmem:[%s311 + $0x1] sm:$0xff]
      %v345 = vld [vmem:[%s311 + $0x9] sm:$0xff]
      %v346 = vld [vmem:[%s311 + $0x19] sm:$0xff]
      %v347 = vld [vmem:[%s311 + $0x21] sm:$0xff]
      %v348 = vld [vmem:[%s311 + $0x31] sm:$0xff]
      %v349 = vld [vmem:[%s311 + $0x39] sm:$0xff]
      %v350 = vld [vmem:[%s311 + $0x49] sm:$0xff]
      %v351 = vld [vmem:[%s311 + $0x51] sm:$0xff]
      %v352 = vld [vmem:[%s311 + $0x61] sm:$0xff]
      %v353 = vld [vmem:[%s311 + $0x69] sm:$0xff]
      %v354 = vld [vmem:[%s311 + $0x79] sm:$0xff]
      %v355 = vld [vmem:[%s311 + $0x81] sm:$0xff]
      %v356 = vld [vmem:[%s311 + $0x91] sm:$0xff]
      %v357 = vld [vmem:[%s311 + $0x99] sm:$0xff]
      %v358 = vld [vmem:[%s311 + $0xa9] sm:$0xff]
      %v359 = vld [vmem:[%s311 + $0xb1] sm:$0xff]
      %v360 = vld [vmem:[%s311 + $0xc1] sm:$0xff]
      %v361 = vld [vmem:[%s311 + $0xc9] sm:$0xff]
      %v362 = vld [vmem:[%s311 + $0xd9] sm:$0xff]
      %v363 = vld [vmem:[%s311 + $0xe1] sm:$0xff]
      %v364 = vld [vmem:[%s311 + $0xf1] sm:$0xff]
      %v365 = vld [vmem:[%s311 + $0xf9] sm:$0xff]
      %v366 = vld [vmem:[%s311 + $0x109] sm:$0xff]
      %v367 = vld [vmem:[%s311 + $0x111] sm:$0xff]
      %v368 = vld [vmem:[%s311 + $0x121] sm:$0xff]
      %v369 = vld [vmem:[%s311 + $0x129] sm:$0xff]
      %v370 = vld [vmem:[%s311 + $0x139] sm:$0xff]
      %v371 = vld [vmem:[%s311 + $0x141] sm:$0xff]
      %v372 = vld [vmem:[%s311 + $0x151] sm:$0xff]
      %v373 = vld [vmem:[%s311 + $0x159] sm:$0xff]
      %v374 = vld [vmem:[%s311 + $0x169] sm:$0xff]
      %v375 = vld [vmem:[%s311 + $0x171] sm:$0xff]
      %v376 = vld [vmem:[%s311 + $0x2] sm:$0xff]
      %v377 = vld [vmem:[%s311 + $0xa] sm:$0xff]
      %v378 = vld [vmem:[%s311 + $0x1a] sm:$0xff]
      %v379 = vld [vmem:[%s311 + $0x22] sm:$0xff]
      %v380 = vld [vmem:[%s311 + $0x32] sm:$0xff]
      %v381 = vld [vmem:[%s311 + $0x3a] sm:$0xff]
      %v382 = vld [vmem:[%s311 + $0x4a] sm:$0xff]
      %v383 = vld [vmem:[%s311 + $0x52] sm:$0xff]
      %v384 = vld [vmem:[%s311 + $0x62] sm:$0xff]
      %v385 = vld [vmem:[%s311 + $0x6a] sm:$0xff]
      %v386 = vld [vmem:[%s311 + $0x7a] sm:$0xff]
      %v387 = vld [vmem:[%s311 + $0x82] sm:$0xff]
      %v388 = vld [vmem:[%s311 + $0x92] sm:$0xff]
      %v389 = vld [vmem:[%s311 + $0x9a] sm:$0xff]
      %v390 = vld [vmem:[%s311 + $0xaa] sm:$0xff]
      %v391 = vld [vmem:[%s311 + $0xb2] sm:$0xff]
      %v392 = vld [vmem:[%s311 + $0xc2] sm:$0xff]
      %v393 = vld [vmem:[%s311 + $0xca] sm:$0xff]
      %v394 = vld [vmem:[%s311 + $0xda] sm:$0xff]
      %v395 = vld [vmem:[%s311 + $0xe2] sm:$0xff]
      %v396 = vld [vmem:[%s311 + $0xf2] sm:$0xff]
      %v397 = vld [vmem:[%s311 + $0xfa] sm:$0xff]
      %v398 = vld [vmem:[%s311 + $0x10a] sm:$0xff]
      %v399 = vld [vmem:[%s311 + $0x112] sm:$0xff]
      %v400 = vld [vmem:[%s311 + $0x122] sm:$0xff]
      %v401 = vld [vmem:[%s311 + $0x12a] sm:$0xff]
      %v402 = vld [vmem:[%s311 + $0x13a] sm:$0xff]
      %v403 = vld [vmem:[%s311 + $0x142] sm:$0xff]
      %v404 = vld [vmem:[%s311 + $0x152] sm:$0xff]
      %v405 = vld [vmem:[%s311 + $0x15a] sm:$0xff]
      %v406 = vld [vmem:[%s311 + $0x16a] sm:$0xff]
      %v407 = vld [vmem:[%s311 + $0x172] sm:$0xff]
      %s408 = scalar_lea.vmem %s203, 48
      %v409 = vld [vmem:[%s408] sm:$0xff]
      %v410 = vld [vmem:[%s408 + $0x8] sm:$0xff]
      %v411 = vld [vmem:[%s408 + $0x18] sm:$0xff]
      %v412 = vld [vmem:[%s408 + $0x20] sm:$0xff]
      %v413 = vld [vmem:[%s408 + $0x30] sm:$0xff]
      %v414 = vld [vmem:[%s408 + $0x38] sm:$0xff]
      %v415 = vld [vmem:[%s408 + $0x48] sm:$0xff]
      %v416 = vld [vmem:[%s408 + $0x50] sm:$0xff]
      %v417 = vld [vmem:[%s408 + $0x60] sm:$0xff]
      %v418 = vld [vmem:[%s408 + $0x68] sm:$0xff]
      %v419 = vld [vmem:[%s408 + $0x78] sm:$0xff]
      %v420 = vld [vmem:[%s408 + $0x80] sm:$0xff]
      %v421 = vld [vmem:[%s408 + $0x90] sm:$0xff]
      %v422 = vld [vmem:[%s408 + $0x98] sm:$0xff]
      %v423 = vld [vmem:[%s408 + $0xa8] sm:$0xff]
      %v424 = vld [vmem:[%s408 + $0xb0] sm:$0xff]
      %v425 = vld [vmem:[%s408 + $0xc0] sm:$0xff]
      %v426 = vld [vmem:[%s408 + $0xc8] sm:$0xff]
      %v427 = vld [vmem:[%s408 + $0xd8] sm:$0xff]
      %v428 = vld [vmem:[%s408 + $0xe0] sm:$0xff]
      %v429 = vld [vmem:[%s408 + $0xf0] sm:$0xff]
      %v430 = vld [vmem:[%s408 + $0xf8] sm:$0xff]
      %v431 = vld [vmem:[%s408 + $0x108] sm:$0xff]
      %v432 = vld [vmem:[%s408 + $0x110] sm:$0xff]
      %v433 = vld [vmem:[%s408 + $0x120] sm:$0xff]
      %v434 = vld [vmem:[%s408 + $0x128] sm:$0xff]
      %v435 = vld [vmem:[%s408 + $0x138] sm:$0xff]
      %v436 = vld [vmem:[%s408 + $0x140] sm:$0xff]
      %v437 = vld [vmem:[%s408 + $0x150] sm:$0xff]
      %v438 = vld [vmem:[%s408 + $0x158] sm:$0xff]
      %v439 = vld [vmem:[%s408 + $0x168] sm:$0xff]
      %v440 = vld [vmem:[%s408 + $0x170] sm:$0xff]
      %v441 = vld [vmem:[%s408 + $0x1] sm:$0xff]
      %v442 = vld [vmem:[%s408 + $0x9] sm:$0xff]
      %v443 = vld [vmem:[%s408 + $0x19] sm:$0xff]
      %v444 = vld [vmem:[%s408 + $0x21] sm:$0xff]
      %v445 = vld [vmem:[%s408 + $0x31] sm:$0xff]
      %v446 = vld [vmem:[%s408 + $0x39] sm:$0xff]
      %v447 = vld [vmem:[%s408 + $0x49] sm:$0xff]
      %v448 = vld [vmem:[%s408 + $0x51] sm:$0xff]
      %v449 = vld [vmem:[%s408 + $0x61] sm:$0xff]
      %v450 = vld [vmem:[%s408 + $0x69] sm:$0xff]
      %v451 = vld [vmem:[%s408 + $0x79] sm:$0xff]
      %v452 = vld [vmem:[%s408 + $0x81] sm:$0xff]
      %v453 = vld [vmem:[%s408 + $0x91] sm:$0xff]
      %v454 = vld [vmem:[%s408 + $0x99] sm:$0xff]
      %v455 = vld [vmem:[%s408 + $0xa9] sm:$0xff]
      %v456 = vld [vmem:[%s408 + $0xb1] sm:$0xff]
      %v457 = vld [vmem:[%s408 + $0xc1] sm:$0xff]
      %v458 = vld [vmem:[%s408 + $0xc9] sm:$0xff]
      %v459 = vld [vmem:[%s408 + $0xd9] sm:$0xff]
      %v460 = vld [vmem:[%s408 + $0xe1] sm:$0xff]
      %v461 = vld [vmem:[%s408 + $0xf1] sm:$0xff]
      %v462 = vld [vmem:[%s408 + $0xf9] sm:$0xff]
      %v463 = vld [vmem:[%s408 + $0x109] sm:$0xff]
      %v464 = vld [vmem:[%s408 + $0x111] sm:$0xff]
      %v465 = vld [vmem:[%s408 + $0x121] sm:$0xff]
      %v466 = vld [vmem:[%s408 + $0x129] sm:$0xff]
      %v467 = vld [vmem:[%s408 + $0x139] sm:$0xff]
      %v468 = vld [vmem:[%s408 + $0x141] sm:$0xff]
      %v469 = vld [vmem:[%s408 + $0x151] sm:$0xff]
      %v470 = vld [vmem:[%s408 + $0x159] sm:$0xff]
      %v471 = vld [vmem:[%s408 + $0x169] sm:$0xff]
      %v472 = vld [vmem:[%s408 + $0x171] sm:$0xff]
      %v473 = vld [vmem:[%s408 + $0x2] sm:$0xff]
      %v474 = vld [vmem:[%s408 + $0xa] sm:$0xff]
      %v475 = vld [vmem:[%s408 + $0x1a] sm:$0xff]
      %v476 = vld [vmem:[%s408 + $0x22] sm:$0xff]
      %v477 = vld [vmem:[%s408 + $0x32] sm:$0xff]
      %v478 = vld [vmem:[%s408 + $0x3a] sm:$0xff]
      %v479 = vld [vmem:[%s408 + $0x4a] sm:$0xff]
      %v480 = vld [vmem:[%s408 + $0x52] sm:$0xff]
      %v481 = vld [vmem:[%s408 + $0x62] sm:$0xff]
      %v482 = vld [vmem:[%s408 + $0x6a] sm:$0xff]
      %v483 = vld [vmem:[%s408 + $0x7a] sm:$0xff]
      %v484 = vld [vmem:[%s408 + $0x82] sm:$0xff]
      %v485 = vld [vmem:[%s408 + $0x92] sm:$0xff]
      %v486 = vld [vmem:[%s408 + $0x9a] sm:$0xff]
      %v487 = vld [vmem:[%s408 + $0xaa] sm:$0xff]
      %v488 = vld [vmem:[%s408 + $0xb2] sm:$0xff]
      %v489 = vld [vmem:[%s408 + $0xc2] sm:$0xff]
      %v490 = vld [vmem:[%s408 + $0xca] sm:$0xff]
      %v491 = vld [vmem:[%s408 + $0xda] sm:$0xff]
      %v492 = vld [vmem:[%s408 + $0xe2] sm:$0xff]
      %v493 = vld [vmem:[%s408 + $0xf2] sm:$0xff]
      %v494 = vld [vmem:[%s408 + $0xfa] sm:$0xff]
      %v495 = vld [vmem:[%s408 + $0x10a] sm:$0xff]
      %v496 = vld [vmem:[%s408 + $0x112] sm:$0xff]
      %v497 = vld [vmem:[%s408 + $0x122] sm:$0xff]
      %v498 = vld [vmem:[%s408 + $0x12a] sm:$0xff]
      %v499 = vld [vmem:[%s408 + $0x13a] sm:$0xff]
      %v500 = vld [vmem:[%s408 + $0x142] sm:$0xff]
      %v501 = vld [vmem:[%s408 + $0x152] sm:$0xff]
      %v502 = vld [vmem:[%s408 + $0x15a] sm:$0xff]
      %v503 = vld [vmem:[%s408 + $0x16a] sm:$0xff]
      %v504 = vld [vmem:[%s408 + $0x172] sm:$0xff]
      %537 = vrot.lane.b32.xlu0 %v247, 4
      %v538 = vpop.permute.xlu0 %537
      %539 = vrot.lane.b32.xlu0 %v248, 4
      %v540 = vpop.permute.xlu0 %539
      %541 = vrot.lane.b32.xlu0 %v249, 4
      %v542 = vpop.permute.xlu0 %541
      %543 = vrot.lane.b32.xlu0 %v250, 4
      %v544 = vpop.permute.xlu0 %543
      %545 = vrot.lane.b32.xlu0 %v251, 4
      %v546 = vpop.permute.xlu0 %545
      %547 = vrot.lane.b32.xlu0 %v252, 4
      %v548 = vpop.permute.xlu0 %547
      %549 = vrot.lane.b32.xlu0 %v253, 4
      %v550 = vpop.permute.xlu0 %549
      %551 = vrot.lane.b32.xlu0 %v254, 4
      %v552 = vpop.permute.xlu0 %551
      %553 = vrot.lane.b32.xlu0 %v255, 4
      %v554 = vpop.permute.xlu0 %553
      %555 = vrot.lane.b32.xlu0 %v256, 4
      %v556 = vpop.permute.xlu0 %555
      %557 = vrot.lane.b32.xlu0 %v257, 4
      %v558 = vpop.permute.xlu0 %557
      %559 = vrot.lane.b32.xlu0 %v258, 4
      %v560 = vpop.permute.xlu0 %559
      %561 = vrot.lane.b32.xlu0 %v259, 4
      %v562 = vpop.permute.xlu0 %561
      %563 = vrot.lane.b32.xlu0 %v260, 4
      %v564 = vpop.permute.xlu0 %563
      %565 = vrot.lane.b32.xlu0 %v261, 4
      %v566 = vpop.permute.xlu0 %565
      %567 = vrot.lane.b32.xlu0 %v262, 4
      %v568 = vpop.permute.xlu0 %567
      %569 = vrot.lane.b32.xlu0 %v263, 4
      %v570 = vpop.permute.xlu0 %569
      %571 = vrot.lane.b32.xlu0 %v264, 4
      %v572 = vpop.permute.xlu0 %571
      %573 = vrot.lane.b32.xlu0 %v265, 4
      %v574 = vpop.permute.xlu0 %573
      %575 = vrot.lane.b32.xlu0 %v266, 4
      %v576 = vpop.permute.xlu0 %575
      %577 = vrot.lane.b32.xlu0 %v267, 4
      %v578 = vpop.permute.xlu0 %577
      %579 = vrot.lane.b32.xlu0 %v268, 4
      %v580 = vpop.permute.xlu0 %579
      %581 = vrot.lane.b32.xlu0 %v269, 4
      %v582 = vpop.permute.xlu0 %581
      %583 = vrot.lane.b32.xlu0 %v270, 4
      %v584 = vpop.permute.xlu0 %583
      %585 = vrot.lane.b32.xlu0 %v271, 4
      %v586 = vpop.permute.xlu0 %585
      %587 = vrot.lane.b32.xlu0 %v272, 4
      %v588 = vpop.permute.xlu0 %587
      %589 = vrot.lane.b32.xlu0 %v273, 4
      %v590 = vpop.permute.xlu0 %589
      %591 = vrot.lane.b32.xlu0 %v274, 4
      %v592 = vpop.permute.xlu0 %591
      %593 = vrot.lane.b32.xlu0 %v275, 4
      %v594 = vpop.permute.xlu0 %593
      %595 = vrot.lane.b32.xlu0 %v276, 4
      %v596 = vpop.permute.xlu0 %595
      %597 = vrot.lane.b32.xlu0 %v277, 4
      %v598 = vpop.permute.xlu0 %597
      %599 = vrot.lane.b32.xlu0 %v278, 4
      %v600 = vpop.permute.xlu0 %599
      %665 = vrot.lane.b32.xlu0 %v279, 8
      %v666 = vpop.permute.xlu0 %665
      %667 = vrot.lane.b32.xlu0 %v280, 8
      %v668 = vpop.permute.xlu0 %667
      %669 = vrot.lane.b32.xlu0 %v281, 8
      %v670 = vpop.permute.xlu0 %669
      %671 = vrot.lane.b32.xlu0 %v282, 8
      %v672 = vpop.permute.xlu0 %671
      %673 = vrot.lane.b32.xlu0 %v283, 8
      %v674 = vpop.permute.xlu0 %673
      %675 = vrot.lane.b32.xlu0 %v284, 8
      %v676 = vpop.permute.xlu0 %675
      %677 = vrot.lane.b32.xlu0 %v285, 8
      %v678 = vpop.permute.xlu0 %677
      %679 = vrot.lane.b32.xlu0 %v286, 8
      %v680 = vpop.permute.xlu0 %679
      %681 = vrot.lane.b32.xlu0 %v287, 8
      %v682 = vpop.permute.xlu0 %681
      %683 = vrot.lane.b32.xlu0 %v288, 8
      %v684 = vpop.permute.xlu0 %683
      %685 = vrot.lane.b32.xlu0 %v289, 8
      %v686 = vpop.permute.xlu0 %685
      %687 = vrot.lane.b32.xlu0 %v290, 8
      %v688 = vpop.permute.xlu0 %687
      %689 = vrot.lane.b32.xlu0 %v291, 8
      %v690 = vpop.permute.xlu0 %689
      %691 = vrot.lane.b32.xlu0 %v292, 8
      %v692 = vpop.permute.xlu0 %691
      %693 = vrot.lane.b32.xlu0 %v293, 8
      %v694 = vpop.permute.xlu0 %693
      %695 = vrot.lane.b32.xlu0 %v294, 8
      %v696 = vpop.permute.xlu0 %695
      %697 = vrot.lane.b32.xlu0 %v295, 8
      %v698 = vpop.permute.xlu0 %697
      %699 = vrot.lane.b32.xlu0 %v296, 8
      %v700 = vpop.permute.xlu0 %699
      %701 = vrot.lane.b32.xlu0 %v297, 8
      %v702 = vpop.permute.xlu0 %701
      %703 = vrot.lane.b32.xlu0 %v298, 8
      %v704 = vpop.permute.xlu0 %703
      %705 = vrot.lane.b32.xlu0 %v299, 8
      %v706 = vpop.permute.xlu0 %705
      %707 = vrot.lane.b32.xlu0 %v300, 8
      %v708 = vpop.permute.xlu0 %707
      %709 = vrot.lane.b32.xlu0 %v301, 8
      %v710 = vpop.permute.xlu0 %709
      %711 = vrot.lane.b32.xlu0 %v302, 8
      %v712 = vpop.permute.xlu0 %711
      %713 = vrot.lane.b32.xlu0 %v303, 8
      %v714 = vpop.permute.xlu0 %713
      %715 = vrot.lane.b32.xlu0 %v304, 8
      %v716 = vpop.permute.xlu0 %715
      %717 = vrot.lane.b32.xlu0 %v305, 8
      %v718 = vpop.permute.xlu0 %717
      %719 = vrot.lane.b32.xlu0 %v306, 8
      %v720 = vpop.permute.xlu0 %719
      %721 = vrot.lane.b32.xlu0 %v307, 8
      %v722 = vpop.permute.xlu0 %721
      %723 = vrot.lane.b32.xlu0 %v308, 8
      %v724 = vpop.permute.xlu0 %723
      %725 = vrot.lane.b32.xlu0 %v309, 8
      %v726 = vpop.permute.xlu0 %725
      %727 = vrot.lane.b32.xlu0 %v310, 8
      %v728 = vpop.permute.xlu0 %727
      %793 = vrot.lane.b32.xlu0 %v312, 12
      %v794 = vpop.permute.xlu0 %793
      %795 = vrot.lane.b32.xlu0 %v313, 12
      %v796 = vpop.permute.xlu0 %795
      %797 = vrot.lane.b32.xlu0 %v314, 12
      %v798 = vpop.permute.xlu0 %797
      %799 = vrot.lane.b32.xlu0 %v315, 12
      %v800 = vpop.permute.xlu0 %799
      %801 = vrot.lane.b32.xlu0 %v316, 12
      %v802 = vpop.permute.xlu0 %801
      %803 = vrot.lane.b32.xlu0 %v317, 12
      %v804 = vpop.permute.xlu0 %803
      %805 = vrot.lane.b32.xlu0 %v318, 12
      %v806 = vpop.permute.xlu0 %805
      %807 = vrot.lane.b32.xlu0 %v319, 12
      %v808 = vpop.permute.xlu0 %807
      %809 = vrot.lane.b32.xlu0 %v320, 12
      %v810 = vpop.permute.xlu0 %809
      %811 = vrot.lane.b32.xlu0 %v321, 12
      %v812 = vpop.permute.xlu0 %811
      %813 = vrot.lane.b32.xlu0 %v322, 12
      %v814 = vpop.permute.xlu0 %813
      %815 = vrot.lane.b32.xlu0 %v323, 12
      %v816 = vpop.permute.xlu0 %815
      %817 = vrot.lane.b32.xlu0 %v324, 12
      %v818 = vpop.permute.xlu0 %817
      %819 = vrot.lane.b32.xlu0 %v325, 12
      %v820 = vpop.permute.xlu0 %819
      %821 = vrot.lane.b32.xlu0 %v326, 12
      %v822 = vpop.permute.xlu0 %821
      %823 = vrot.lane.b32.xlu0 %v327, 12
      %v824 = vpop.permute.xlu0 %823
      %825 = vrot.lane.b32.xlu0 %v328, 12
      %v826 = vpop.permute.xlu0 %825
      %827 = vrot.lane.b32.xlu0 %v329, 12
      %v828 = vpop.permute.xlu0 %827
      %829 = vrot.lane.b32.xlu0 %v330, 12
      %v830 = vpop.permute.xlu0 %829
      %831 = vrot.lane.b32.xlu0 %v331, 12
      %v832 = vpop.permute.xlu0 %831
      %833 = vrot.lane.b32.xlu0 %v332, 12
      %v834 = vpop.permute.xlu0 %833
      %835 = vrot.lane.b32.xlu0 %v333, 12
      %v836 = vpop.permute.xlu0 %835
      %837 = vrot.lane.b32.xlu0 %v334, 12
      %v838 = vpop.permute.xlu0 %837
      %839 = vrot.lane.b32.xlu0 %v335, 12
      %v840 = vpop.permute.xlu0 %839
      %841 = vrot.lane.b32.xlu0 %v336, 12
      %v842 = vpop.permute.xlu0 %841
      %843 = vrot.lane.b32.xlu0 %v337, 12
      %v844 = vpop.permute.xlu0 %843
      %845 = vrot.lane.b32.xlu0 %v338, 12
      %v846 = vpop.permute.xlu0 %845
      %847 = vrot.lane.b32.xlu0 %v339, 12
      %v848 = vpop.permute.xlu0 %847
      %849 = vrot.lane.b32.xlu0 %v340, 12
      %v850 = vpop.permute.xlu0 %849
      %851 = vrot.lane.b32.xlu0 %v341, 12
      %v852 = vpop.permute.xlu0 %851
      %853 = vrot.lane.b32.xlu0 %v342, 12
      %v854 = vpop.permute.xlu0 %853
      %855 = vrot.lane.b32.xlu0 %v343, 12
      %v856 = vpop.permute.xlu0 %855
      %921 = vrot.lane.b32.xlu0 %v344, 16
      %v922 = vpop.permute.xlu0 %921
      %923 = vrot.lane.b32.xlu0 %v345, 16
      %v924 = vpop.permute.xlu0 %923
      %925 = vrot.lane.b32.xlu0 %v346, 16
      %v926 = vpop.permute.xlu0 %925
      %927 = vrot.lane.b32.xlu0 %v347, 16
      %v928 = vpop.permute.xlu0 %927
      %929 = vrot.lane.b32.xlu0 %v348, 16
      %v930 = vpop.permute.xlu0 %929
      %931 = vrot.lane.b32.xlu0 %v349, 16
      %v932 = vpop.permute.xlu0 %931
      %933 = vrot.lane.b32.xlu0 %v350, 16
      %v934 = vpop.permute.xlu0 %933
      %935 = vrot.lane.b32.xlu0 %v351, 16
      %v936 = vpop.permute.xlu0 %935
      %937 = vrot.lane.b32.xlu0 %v352, 16
      %v938 = vpop.permute.xlu0 %937
      %939 = vrot.lane.b32.xlu0 %v353, 16
      %v940 = vpop.permute.xlu0 %939
      %941 = vrot.lane.b32.xlu0 %v354, 16
      %v942 = vpop.permute.xlu0 %941
      %943 = vrot.lane.b32.xlu0 %v355, 16
      %v944 = vpop.permute.xlu0 %943
      %945 = vrot.lane.b32.xlu0 %v356, 16
      %v946 = vpop.permute.xlu0 %945
      %947 = vrot.lane.b32.xlu0 %v357, 16
      %v948 = vpop.permute.xlu0 %947
      %949 = vrot.lane.b32.xlu0 %v358, 16
      %v950 = vpop.permute.xlu0 %949
      %951 = vrot.lane.b32.xlu0 %v359, 16
      %v952 = vpop.permute.xlu0 %951
      %953 = vrot.lane.b32.xlu0 %v360, 16
      %v954 = vpop.permute.xlu0 %953
      %955 = vrot.lane.b32.xlu0 %v361, 16
      %v956 = vpop.permute.xlu0 %955
      %957 = vrot.lane.b32.xlu0 %v362, 16
      %v958 = vpop.permute.xlu0 %957
      %959 = vrot.lane.b32.xlu0 %v363, 16
      %v960 = vpop.permute.xlu0 %959
      %961 = vrot.lane.b32.xlu0 %v364, 16
      %v962 = vpop.permute.xlu0 %961
      %963 = vrot.lane.b32.xlu0 %v365, 16
      %v964 = vpop.permute.xlu0 %963
      %965 = vrot.lane.b32.xlu0 %v366, 16
      %v966 = vpop.permute.xlu0 %965
      %967 = vrot.lane.b32.xlu0 %v367, 16
      %v968 = vpop.permute.xlu0 %967
      %969 = vrot.lane.b32.xlu0 %v368, 16
      %v970 = vpop.permute.xlu0 %969
      %971 = vrot.lane.b32.xlu0 %v369, 16
      %v972 = vpop.permute.xlu0 %971
      %973 = vrot.lane.b32.xlu0 %v370, 16
      %v974 = vpop.permute.xlu0 %973
      %975 = vrot.lane.b32.xlu0 %v371, 16
      %v976 = vpop.permute.xlu0 %975
      %977 = vrot.lane.b32.xlu0 %v372, 16
      %v978 = vpop.permute.xlu0 %977
      %979 = vrot.lane.b32.xlu0 %v373, 16
      %v980 = vpop.permute.xlu0 %979
      %981 = vrot.lane.b32.xlu0 %v374, 16
      %v982 = vpop.permute.xlu0 %981
      %983 = vrot.lane.b32.xlu0 %v375, 16
      %v984 = vpop.permute.xlu0 %983
      %1049 = vrot.lane.b32.xlu0 %v376, 20
      %v1050 = vpop.permute.xlu0 %1049
      %1051 = vrot.lane.b32.xlu0 %v377, 20
      %v1052 = vpop.permute.xlu0 %1051
      %1053 = vrot.lane.b32.xlu0 %v378, 20
      %v1054 = vpop.permute.xlu0 %1053
      %1055 = vrot.lane.b32.xlu0 %v379, 20
      %v1056 = vpop.permute.xlu0 %1055
      %1057 = vrot.lane.b32.xlu0 %v380, 20
      %v1058 = vpop.permute.xlu0 %1057
      %1059 = vrot.lane.b32.xlu0 %v381, 20
      %v1060 = vpop.permute.xlu0 %1059
      %1061 = vrot.lane.b32.xlu0 %v382, 20
      %v1062 = vpop.permute.xlu0 %1061
      %1063 = vrot.lane.b32.xlu0 %v383, 20
      %v1064 = vpop.permute.xlu0 %1063
      %1065 = vrot.lane.b32.xlu0 %v384, 20
      %v1066 = vpop.permute.xlu0 %1065
      %1067 = vrot.lane.b32.xlu0 %v385, 20
      %v1068 = vpop.permute.xlu0 %1067
      %1069 = vrot.lane.b32.xlu0 %v386, 20
      %v1070 = vpop.permute.xlu0 %1069
      %1071 = vrot.lane.b32.xlu0 %v387, 20
      %v1072 = vpop.permute.xlu0 %1071
      %1073 = vrot.lane.b32.xlu0 %v388, 20
      %v1074 = vpop.permute.xlu0 %1073
      %1075 = vrot.lane.b32.xlu0 %v389, 20
      %v1076 = vpop.permute.xlu0 %1075
      %1077 = vrot.lane.b32.xlu0 %v390, 20
      %v1078 = vpop.permute.xlu0 %1077
      %1079 = vrot.lane.b32.xlu0 %v391, 20
      %v1080 = vpop.permute.xlu0 %1079
      %1081 = vrot.lane.b32.xlu0 %v392, 20
      %v1082 = vpop.permute.xlu0 %1081
      %1083 = vrot.lane.b32.xlu0 %v393, 20
      %v1084 = vpop.permute.xlu0 %1083
      %1085 = vrot.lane.b32.xlu0 %v394, 20
      %v1086 = vpop.permute.xlu0 %1085
      %1087 = vrot.lane.b32.xlu0 %v395, 20
      %v1088 = vpop.permute.xlu0 %1087
      %1089 = vrot.lane.b32.xlu0 %v396, 20
      %v1090 = vpop.permute.xlu0 %1089
      %1091 = vrot.lane.b32.xlu0 %v397, 20
      %v1092 = vpop.permute.xlu0 %1091
      %1093 = vrot.lane.b32.xlu0 %v398, 20
      %v1094 = vpop.permute.xlu0 %1093
      %1095 = vrot.lane.b32.xlu0 %v399, 20
      %v1096 = vpop.permute.xlu0 %1095
      %1097 = vrot.lane.b32.xlu0 %v400, 20
      %v1098 = vpop.permute.xlu0 %1097
      %1099 = vrot.lane.b32.xlu0 %v401, 20
      %v1100 = vpop.permute.xlu0 %1099
      %1101 = vrot.lane.b32.xlu0 %v402, 20
      %v1102 = vpop.permute.xlu0 %1101
      %1103 = vrot.lane.b32.xlu0 %v403, 20
      %v1104 = vpop.permute.xlu0 %1103
      %1105 = vrot.lane.b32.xlu0 %v404, 20
      %v1106 = vpop.permute.xlu0 %1105
      %1107 = vrot.lane.b32.xlu0 %v405, 20
      %v1108 = vpop.permute.xlu0 %1107
      %1109 = vrot.lane.b32.xlu0 %v406, 20
      %v1110 = vpop.permute.xlu0 %1109
      %1111 = vrot.lane.b32.xlu0 %v407, 20
      %v1112 = vpop.permute.xlu0 %1111
      %1177 = vrot.lane.b32.xlu0 %v409, 24
      %v1178 = vpop.permute.xlu0 %1177
      %1179 = vrot.lane.b32.xlu0 %v410, 24
      %v1180 = vpop.permute.xlu0 %1179
      %1181 = vrot.lane.b32.xlu0 %v411, 24
      %v1182 = vpop.permute.xlu0 %1181
      %1183 = vrot.lane.b32.xlu0 %v412, 24
      %v1184 = vpop.permute.xlu0 %1183
      %1185 = vrot.lane.b32.xlu0 %v413, 24
      %v1186 = vpop.permute.xlu0 %1185
      %1187 = vrot.lane.b32.xlu0 %v414, 24
      %v1188 = vpop.permute.xlu0 %1187
      %1189 = vrot.lane.b32.xlu0 %v415, 24
      %v1190 = vpop.permute.xlu0 %1189
      %1191 = vrot.lane.b32.xlu0 %v416, 24
      %v1192 = vpop.permute.xlu0 %1191
      %1193 = vrot.lane.b32.xlu0 %v417, 24
      %v1194 = vpop.permute.xlu0 %1193
      %1195 = vrot.lane.b32.xlu0 %v418, 24
      %v1196 = vpop.permute.xlu0 %1195
      %1197 = vrot.lane.b32.xlu0 %v419, 24
      %v1198 = vpop.permute.xlu0 %1197
      %1199 = vrot.lane.b32.xlu0 %v420, 24
      %v1200 = vpop.permute.xlu0 %1199
      %1201 = vrot.lane.b32.xlu0 %v421, 24
      %v1202 = vpop.permute.xlu0 %1201
      %1203 = vrot.lane.b32.xlu0 %v422, 24
      %v1204 = vpop.permute.xlu0 %1203
      %1205 = vrot.lane.b32.xlu0 %v423, 24
      %v1206 = vpop.permute.xlu0 %1205
      %1207 = vrot.lane.b32.xlu0 %v424, 24
      %v1208 = vpop.permute.xlu0 %1207
      %1209 = vrot.lane.b32.xlu0 %v425, 24
      %v1210 = vpop.permute.xlu0 %1209
      %1211 = vrot.lane.b32.xlu0 %v426, 24
      %v1212 = vpop.permute.xlu0 %1211
      %1213 = vrot.lane.b32.xlu0 %v427, 24
      %v1214 = vpop.permute.xlu0 %1213
      %1215 = vrot.lane.b32.xlu0 %v428, 24
      %v1216 = vpop.permute.xlu0 %1215
      %1217 = vrot.lane.b32.xlu0 %v429, 24
      %v1218 = vpop.permute.xlu0 %1217
      %1219 = vrot.lane.b32.xlu0 %v430, 24
      %v1220 = vpop.permute.xlu0 %1219
      %1221 = vrot.lane.b32.xlu0 %v431, 24
      %v1222 = vpop.permute.xlu0 %1221
      %1223 = vrot.lane.b32.xlu0 %v432, 24
      %v1224 = vpop.permute.xlu0 %1223
      %1225 = vrot.lane.b32.xlu0 %v433, 24
      %v1226 = vpop.permute.xlu0 %1225
      %1227 = vrot.lane.b32.xlu0 %v434, 24
      %v1228 = vpop.permute.xlu0 %1227
      %1229 = vrot.lane.b32.xlu0 %v435, 24
      %v1230 = vpop.permute.xlu0 %1229
      %1231 = vrot.lane.b32.xlu0 %v436, 24
      %v1232 = vpop.permute.xlu0 %1231
      %1233 = vrot.lane.b32.xlu0 %v437, 24
      %v1234 = vpop.permute.xlu0 %1233
      %1235 = vrot.lane.b32.xlu0 %v438, 24
      %v1236 = vpop.permute.xlu0 %1235
      %1237 = vrot.lane.b32.xlu0 %v439, 24
      %v1238 = vpop.permute.xlu0 %1237
      %1239 = vrot.lane.b32.xlu0 %v440, 24
      %v1240 = vpop.permute.xlu0 %1239
      %1305 = vrot.lane.b32.xlu0 %v441, 28
      %v1306 = vpop.permute.xlu0 %1305
      %1307 = vrot.lane.b32.xlu0 %v442, 28
      %v1308 = vpop.permute.xlu0 %1307
      %1309 = vrot.lane.b32.xlu0 %v443, 28
      %v1310 = vpop.permute.xlu0 %1309
      %1311 = vrot.lane.b32.xlu0 %v444, 28
      %v1312 = vpop.permute.xlu0 %1311
      %1313 = vrot.lane.b32.xlu0 %v445, 28
      %v1314 = vpop.permute.xlu0 %1313
      %1315 = vrot.lane.b32.xlu0 %v446, 28
      %v1316 = vpop.permute.xlu0 %1315
      %1317 = vrot.lane.b32.xlu0 %v447, 28
      %v1318 = vpop.permute.xlu0 %1317
      %1319 = vrot.lane.b32.xlu0 %v448, 28
      %v1320 = vpop.permute.xlu0 %1319
      %1321 = vrot.lane.b32.xlu0 %v449, 28
      %v1322 = vpop.permute.xlu0 %1321
      %1323 = vrot.lane.b32.xlu0 %v450, 28
      %v1324 = vpop.permute.xlu0 %1323
      %1325 = vrot.lane.b32.xlu0 %v451, 28
      %v1326 = vpop.permute.xlu0 %1325
      %1327 = vrot.lane.b32.xlu0 %v452, 28
      %v1328 = vpop.permute.xlu0 %1327
      %1329 = vrot.lane.b32.xlu0 %v453, 28
      %v1330 = vpop.permute.xlu0 %1329
      %1331 = vrot.lane.b32.xlu0 %v454, 28
      %v1332 = vpop.permute.xlu0 %1331
      %1333 = vrot.lane.b32.xlu0 %v455, 28
      %v1334 = vpop.permute.xlu0 %1333
      %1335 = vrot.lane.b32.xlu0 %v456, 28
      %v1336 = vpop.permute.xlu0 %1335
      %1337 = vrot.lane.b32.xlu0 %v457, 28
      %v1338 = vpop.permute.xlu0 %1337
      %1339 = vrot.lane.b32.xlu0 %v458, 28
      %v1340 = vpop.permute.xlu0 %1339
      %1341 = vrot.lane.b32.xlu0 %v459, 28
      %v1342 = vpop.permute.xlu0 %1341
      %1343 = vrot.lane.b32.xlu0 %v460, 28
      %v1344 = vpop.permute.xlu0 %1343
      %1345 = vrot.lane.b32.xlu0 %v461, 28
      %v1346 = vpop.permute.xlu0 %1345
      %1347 = vrot.lane.b32.xlu0 %v462, 28
      %v1348 = vpop.permute.xlu0 %1347
      %1349 = vrot.lane.b32.xlu0 %v463, 28
      %v1350 = vpop.permute.xlu0 %1349
      %1351 = vrot.lane.b32.xlu0 %v464, 28
      %v1352 = vpop.permute.xlu0 %1351
      %1353 = vrot.lane.b32.xlu0 %v465, 28
      %v1354 = vpop.permute.xlu0 %1353
      %1355 = vrot.lane.b32.xlu0 %v466, 28
      %v1356 = vpop.permute.xlu0 %1355
      %1357 = vrot.lane.b32.xlu0 %v467, 28
      %v1358 = vpop.permute.xlu0 %1357
      %1359 = vrot.lane.b32.xlu0 %v468, 28
      %v1360 = vpop.permute.xlu0 %1359
      %1361 = vrot.lane.b32.xlu0 %v469, 28
      %v1362 = vpop.permute.xlu0 %1361
      %1363 = vrot.lane.b32.xlu0 %v470, 28
      %v1364 = vpop.permute.xlu0 %1363
      %1365 = vrot.lane.b32.xlu0 %v471, 28
      %v1366 = vpop.permute.xlu0 %1365
      %1367 = vrot.lane.b32.xlu0 %v472, 28
      %v1368 = vpop.permute.xlu0 %1367
      %1433 = vrot.lane.b32.xlu0 %v473, 32
      %v1434 = vpop.permute.xlu0 %1433
      %1435 = vrot.lane.b32.xlu0 %v474, 32
      %v1436 = vpop.permute.xlu0 %1435
      %1437 = vrot.lane.b32.xlu0 %v475, 32
      %v1438 = vpop.permute.xlu0 %1437
      %1439 = vrot.lane.b32.xlu0 %v476, 32
      %v1440 = vpop.permute.xlu0 %1439
      %1441 = vrot.lane.b32.xlu0 %v477, 32
      %v1442 = vpop.permute.xlu0 %1441
      %1443 = vrot.lane.b32.xlu0 %v478, 32
      %v1444 = vpop.permute.xlu0 %1443
      %1445 = vrot.lane.b32.xlu0 %v479, 32
      %v1446 = vpop.permute.xlu0 %1445
      %1447 = vrot.lane.b32.xlu0 %v480, 32
      %v1448 = vpop.permute.xlu0 %1447
      %1449 = vrot.lane.b32.xlu0 %v481, 32
      %v1450 = vpop.permute.xlu0 %1449
      %1451 = vrot.lane.b32.xlu0 %v482, 32
      %v1452 = vpop.permute.xlu0 %1451
      %1453 = vrot.lane.b32.xlu0 %v483, 32
      %v1454 = vpop.permute.xlu0 %1453
      %1455 = vrot.lane.b32.xlu0 %v484, 32
      %v1456 = vpop.permute.xlu0 %1455
      %1457 = vrot.lane.b32.xlu0 %v485, 32
      %v1458 = vpop.permute.xlu0 %1457
      %1459 = vrot.lane.b32.xlu0 %v486, 32
      %v1460 = vpop.permute.xlu0 %1459
      %1461 = vrot.lane.b32.xlu0 %v487, 32
      %v1462 = vpop.permute.xlu0 %1461
      %1463 = vrot.lane.b32.xlu0 %v488, 32
      %v1464 = vpop.permute.xlu0 %1463
      %1465 = vrot.lane.b32.xlu0 %v489, 32
      %v1466 = vpop.permute.xlu0 %1465
      %1467 = vrot.lane.b32.xlu0 %v490, 32
      %v1468 = vpop.permute.xlu0 %1467
      %1469 = vrot.lane.b32.xlu0 %v491, 32
      %v1470 = vpop.permute.xlu0 %1469
      %1471 = vrot.lane.b32.xlu0 %v492, 32
      %v1472 = vpop.permute.xlu0 %1471
      %1473 = vrot.lane.b32.xlu0 %v493, 32
      %v1474 = vpop.permute.xlu0 %1473
      %1475 = vrot.lane.b32.xlu0 %v494, 32
      %v1476 = vpop.permute.xlu0 %1475
      %1477 = vrot.lane.b32.xlu0 %v495, 32
      %v1478 = vpop.permute.xlu0 %1477
      %1479 = vrot.lane.b32.xlu0 %v496, 32
      %v1480 = vpop.permute.xlu0 %1479
      %1481 = vrot.lane.b32.xlu0 %v497, 32
      %v1482 = vpop.permute.xlu0 %1481
      %1483 = vrot.lane.b32.xlu0 %v498, 32
      %v1484 = vpop.permute.xlu0 %1483
      %1485 = vrot.lane.b32.xlu0 %v499, 32
      %v1486 = vpop.permute.xlu0 %1485
      %1487 = vrot.lane.b32.xlu0 %v500, 32
      %v1488 = vpop.permute.xlu0 %1487
      %1489 = vrot.lane.b32.xlu0 %v501, 32
      %v1490 = vpop.permute.xlu0 %1489
      %1491 = vrot.lane.b32.xlu0 %v502, 32
      %v1492 = vpop.permute.xlu0 %1491
      %1493 = vrot.lane.b32.xlu0 %v503, 32
      %v1494 = vpop.permute.xlu0 %1493
      %1495 = vrot.lane.b32.xlu0 %v504, 32
      %v1496 = vpop.permute.xlu0 %1495
      %vm1529 = vcmask 31744
      %v1530 = vsel %vm1529, %v215, %v538
      %v1531 = vsel %vm1529, %v216, %v540
      %v1532 = vsel %vm1529, %v217, %v542
      %v1533 = vsel %vm1529, %v218, %v544
      %v1534 = vsel %vm1529, %v219, %v546
      %v1535 = vsel %vm1529, %v220, %v548
      %v1536 = vsel %vm1529, %v221, %v550
      %v1537 = vsel %vm1529, %v222, %v552
      %v1538 = vsel %vm1529, %v223, %v554
      %v1539 = vsel %vm1529, %v224, %v556
      %v1540 = vsel %vm1529, %v225, %v558
      %v1541 = vsel %vm1529, %v226, %v560
      %v1542 = vsel %vm1529, %v227, %v562
      %v1543 = vsel %vm1529, %v228, %v564
      %v1544 = vsel %vm1529, %v229, %v566
      %v1545 = vsel %vm1529, %v230, %v568
      %v1546 = vsel %vm1529, %v231, %v570
      %v1547 = vsel %vm1529, %v232, %v572
      %v1548 = vsel %vm1529, %v233, %v574
      %v1549 = vsel %vm1529, %v234, %v576
      %v1550 = vsel %vm1529, %v235, %v578
      %v1551 = vsel %vm1529, %v236, %v580
      %v1552 = vsel %vm1529, %v237, %v582
      %v1553 = vsel %vm1529, %v238, %v584
      %v1554 = vsel %vm1529, %v239, %v586
      %v1555 = vsel %vm1529, %v240, %v588
      %v1556 = vsel %vm1529, %v241, %v590
      %v1557 = vsel %vm1529, %v242, %v592
      %v1558 = vsel %vm1529, %v243, %v594
      %v1559 = vsel %vm1529, %v244, %v596
      %v1560 = vsel %vm1529, %v245, %v598
      %v1561 = vsel %vm1529, %v246, %v600
      %vm1562 = vcmask 64512
      %v1563 = vsel %vm1562, %v1530, %v666
      %v1564 = vsel %vm1562, %v1531, %v668
      %v1565 = vsel %vm1562, %v1532, %v670
      %v1566 = vsel %vm1562, %v1533, %v672
      %v1567 = vsel %vm1562, %v1534, %v674
      %v1568 = vsel %vm1562, %v1535, %v676
      %v1569 = vsel %vm1562, %v1536, %v678
      %v1570 = vsel %vm1562, %v1537, %v680
      %v1571 = vsel %vm1562, %v1538, %v682
      %v1572 = vsel %vm1562, %v1539, %v684
      %v1573 = vsel %vm1562, %v1540, %v686
      %v1574 = vsel %vm1562, %v1541, %v688
      %v1575 = vsel %vm1562, %v1542, %v690
      %v1576 = vsel %vm1562, %v1543, %v692
      %v1577 = vsel %vm1562, %v1544, %v694
      %v1578 = vsel %vm1562, %v1545, %v696
      %v1579 = vsel %vm1562, %v1546, %v698
      %v1580 = vsel %vm1562, %v1547, %v700
      %v1581 = vsel %vm1562, %v1548, %v702
      %v1582 = vsel %vm1562, %v1549, %v704
      %v1583 = vsel %vm1562, %v1550, %v706
      %v1584 = vsel %vm1562, %v1551, %v708
      %v1585 = vsel %vm1562, %v1552, %v710
      %v1586 = vsel %vm1562, %v1553, %v712
      %v1587 = vsel %vm1562, %v1554, %v714
      %v1588 = vsel %vm1562, %v1555, %v716
      %v1589 = vsel %vm1562, %v1556, %v718
      %v1590 = vsel %vm1562, %v1557, %v720
      %v1591 = vsel %vm1562, %v1558, %v722
      %v1592 = vsel %vm1562, %v1559, %v724
      %v1593 = vsel %vm1562, %v1560, %v726
      %v1594 = vsel %vm1562, %v1561, %v728
      %vm1595 = vcmask 97280
      %v1596 = vsel %vm1595, %v1563, %v794
      %v1597 = vsel %vm1595, %v1564, %v796
      %v1598 = vsel %vm1595, %v1565, %v798
      %v1599 = vsel %vm1595, %v1566, %v800
      %v1600 = vsel %vm1595, %v1567, %v802
      %v1601 = vsel %vm1595, %v1568, %v804
      %v1602 = vsel %vm1595, %v1569, %v806
      %v1603 = vsel %vm1595, %v1570, %v808
      %v1604 = vsel %vm1595, %v1571, %v810
      %v1605 = vsel %vm1595, %v1572, %v812
      %v1606 = vsel %vm1595, %v1573, %v814
      %v1607 = vsel %vm1595, %v1574, %v816
      %v1608 = vsel %vm1595, %v1575, %v818
      %v1609 = vsel %vm1595, %v1576, %v820
      %v1610 = vsel %vm1595, %v1577, %v822
      %v1611 = vsel %vm1595, %v1578, %v824
      %v1612 = vsel %vm1595, %v1579, %v826
      %v1613 = vsel %vm1595, %v1580, %v828
      %v1614 = vsel %vm1595, %v1581, %v830
      %v1615 = vsel %vm1595, %v1582, %v832
      %v1616 = vsel %vm1595, %v1583, %v834
      %v1617 = vsel %vm1595, %v1584, %v836
      %v1618 = vsel %vm1595, %v1585, %v838
      %v1619 = vsel %vm1595, %v1586, %v840
      %v1620 = vsel %vm1595, %v1587, %v842
      %v1621 = vsel %vm1595, %v1588, %v844
      %v1622 = vsel %vm1595, %v1589, %v846
      %v1623 = vsel %vm1595, %v1590, %v848
      %v1624 = vsel %vm1595, %v1591, %v850
      %v1625 = vsel %vm1595, %v1592, %v852
      %v1626 = vsel %vm1595, %v1593, %v854
      %v1627 = vsel %vm1595, %v1594, %v856
      %vm1628 = vcmask 130048
      %v1629 = vsel %vm1628, %v1596, %v922
      %v1630 = vsel %vm1628, %v1597, %v924
      %v1631 = vsel %vm1628, %v1598, %v926
      %v1632 = vsel %vm1628, %v1599, %v928
      %v1633 = vsel %vm1628, %v1600, %v930
      %v1634 = vsel %vm1628, %v1601, %v932
      %v1635 = vsel %vm1628, %v1602, %v934
      %v1636 = vsel %vm1628, %v1603, %v936
      %v1637 = vsel %vm1628, %v1604, %v938
      %v1638 = vsel %vm1628, %v1605, %v940
      %v1639 = vsel %vm1628, %v1606, %v942
      %v1640 = vsel %vm1628, %v1607, %v944
      %v1641 = vsel %vm1628, %v1608, %v946
      %v1642 = vsel %vm1628, %v1609, %v948
      %v1643 = vsel %vm1628, %v1610, %v950
      %v1644 = vsel %vm1628, %v1611, %v952
      %v1645 = vsel %vm1628, %v1612, %v954
      %v1646 = vsel %vm1628, %v1613, %v956
      %v1647 = vsel %vm1628, %v1614, %v958
      %v1648 = vsel %vm1628, %v1615, %v960
      %v1649 = vsel %vm1628, %v1616, %v962
      %v1650 = vsel %vm1628, %v1617, %v964
      %v1651 = vsel %vm1628, %v1618, %v966
      %v1652 = vsel %vm1628, %v1619, %v968
      %v1653 = vsel %vm1628, %v1620, %v970
      %v1654 = vsel %vm1628, %v1621, %v972
      %v1655 = vsel %vm1628, %v1622, %v974
      %v1656 = vsel %vm1628, %v1623, %v976
      %v1657 = vsel %vm1628, %v1624, %v978
      %v1658 = vsel %vm1628, %v1625, %v980
      %v1659 = vsel %vm1628, %v1626, %v982
      %v1660 = vsel %vm1628, %v1627, %v984
      %vm1661 = vcmask 162816
      %v1662 = vsel %vm1661, %v1629, %v1050
      %v1663 = vsel %vm1661, %v1630, %v1052
      %v1664 = vsel %vm1661, %v1631, %v1054
      %v1665 = vsel %vm1661, %v1632, %v1056
      %v1666 = vsel %vm1661, %v1633, %v1058
      %v1667 = vsel %vm1661, %v1634, %v1060
      %v1668 = vsel %vm1661, %v1635, %v1062
      %v1669 = vsel %vm1661, %v1636, %v1064
      %v1670 = vsel %vm1661, %v1637, %v1066
      %v1671 = vsel %vm1661, %v1638, %v1068
      %v1672 = vsel %vm1661, %v1639, %v1070
      %v1673 = vsel %vm1661, %v1640, %v1072
      %v1674 = vsel %vm1661, %v1641, %v1074
      %v1675 = vsel %vm1661, %v1642, %v1076
      %v1676 = vsel %vm1661, %v1643, %v1078
      %v1677 = vsel %vm1661, %v1644, %v1080
      %v1678 = vsel %vm1661, %v1645, %v1082
      %v1679 = vsel %vm1661, %v1646, %v1084
      %v1680 = vsel %vm1661, %v1647, %v1086
      %v1681 = vsel %vm1661, %v1648, %v1088
      %v1682 = vsel %vm1661, %v1649, %v1090
      %v1683 = vsel %vm1661, %v1650, %v1092
      %v1684 = vsel %vm1661, %v1651, %v1094
      %v1685 = vsel %vm1661, %v1652, %v1096
      %v1686 = vsel %vm1661, %v1653, %v1098
      %v1687 = vsel %vm1661, %v1654, %v1100
      %v1688 = vsel %vm1661, %v1655, %v1102
      %v1689 = vsel %vm1661, %v1656, %v1104
      %v1690 = vsel %vm1661, %v1657, %v1106
      %v1691 = vsel %vm1661, %v1658, %v1108
      %v1692 = vsel %vm1661, %v1659, %v1110
      %v1693 = vsel %vm1661, %v1660, %v1112
      %vm1694 = vcmask 195584
      %v1695 = vsel %vm1694, %v1662, %v1178
      %v1696 = vsel %vm1694, %v1663, %v1180
      %v1697 = vsel %vm1694, %v1664, %v1182
      %v1698 = vsel %vm1694, %v1665, %v1184
      %v1699 = vsel %vm1694, %v1666, %v1186
      %v1700 = vsel %vm1694, %v1667, %v1188
      %v1701 = vsel %vm1694, %v1668, %v1190
      %v1702 = vsel %vm1694, %v1669, %v1192
      %v1703 = vsel %vm1694, %v1670, %v1194
      %v1704 = vsel %vm1694, %v1671, %v1196
      %v1705 = vsel %vm1694, %v1672, %v1198
      %v1706 = vsel %vm1694, %v1673, %v1200
      %v1707 = vsel %vm1694, %v1674, %v1202
      %v1708 = vsel %vm1694, %v1675, %v1204
      %v1709 = vsel %vm1694, %v1676, %v1206
      %v1710 = vsel %vm1694, %v1677, %v1208
      %v1711 = vsel %vm1694, %v1678, %v1210
      %v1712 = vsel %vm1694, %v1679, %v1212
      %v1713 = vsel %vm1694, %v1680, %v1214
      %v1714 = vsel %vm1694, %v1681, %v1216
      %v1715 = vsel %vm1694, %v1682, %v1218
      %v1716 = vsel %vm1694, %v1683, %v1220
      %v1717 = vsel %vm1694, %v1684, %v1222
      %v1718 = vsel %vm1694, %v1685, %v1224
      %v1719 = vsel %vm1694, %v1686, %v1226
      %v1720 = vsel %vm1694, %v1687, %v1228
      %v1721 = vsel %vm1694, %v1688, %v1230
      %v1722 = vsel %vm1694, %v1689, %v1232
      %v1723 = vsel %vm1694, %v1690, %v1234
      %v1724 = vsel %vm1694, %v1691, %v1236
      %v1725 = vsel %vm1694, %v1692, %v1238
      %v1726 = vsel %vm1694, %v1693, %v1240
      %vm1727 = vcmask 228352
      %v1728 = vsel %vm1727, %v1695, %v1306
      %v1729 = vsel %vm1727, %v1696, %v1308
      %v1730 = vsel %vm1727, %v1697, %v1310
      %v1731 = vsel %vm1727, %v1698, %v1312
      %v1732 = vsel %vm1727, %v1699, %v1314
      %v1733 = vsel %vm1727, %v1700, %v1316
      %v1734 = vsel %vm1727, %v1701, %v1318
      %v1735 = vsel %vm1727, %v1702, %v1320
      %v1736 = vsel %vm1727, %v1703, %v1322
      %v1737 = vsel %vm1727, %v1704, %v1324
      %v1738 = vsel %vm1727, %v1705, %v1326
      %v1739 = vsel %vm1727, %v1706, %v1328
      %v1740 = vsel %vm1727, %v1707, %v1330
      %v1741 = vsel %vm1727, %v1708, %v1332
      %v1742 = vsel %vm1727, %v1709, %v1334
      %v1743 = vsel %vm1727, %v1710, %v1336
      %v1744 = vsel %vm1727, %v1711, %v1338
      %v1745 = vsel %vm1727, %v1712, %v1340
      %v1746 = vsel %vm1727, %v1713, %v1342
      %v1747 = vsel %vm1727, %v1714, %v1344
      %v1748 = vsel %vm1727, %v1715, %v1346
      %v1749 = vsel %vm1727, %v1716, %v1348
      %v1750 = vsel %vm1727, %v1717, %v1350
      %v1751 = vsel %vm1727, %v1718, %v1352
      %v1752 = vsel %vm1727, %v1719, %v1354
      %v1753 = vsel %vm1727, %v1720, %v1356
      %v1754 = vsel %vm1727, %v1721, %v1358
      %v1755 = vsel %vm1727, %v1722, %v1360
      %v1756 = vsel %vm1727, %v1723, %v1362
      %v1757 = vsel %vm1727, %v1724, %v1364
      %v1758 = vsel %vm1727, %v1725, %v1366
      %v1759 = vsel %vm1727, %v1726, %v1368
      %vm1760 = vcmask 261120
      %v1761 = vsel %vm1760, %v1728, %v1434
      %v1762 = vsel %vm1760, %v1729, %v1436
      %v1763 = vsel %vm1760, %v1730, %v1438
      %v1764 = vsel %vm1760, %v1731, %v1440
      %v1765 = vsel %vm1760, %v1732, %v1442
      %v1766 = vsel %vm1760, %v1733, %v1444
      %v1767 = vsel %vm1760, %v1734, %v1446
      %v1768 = vsel %vm1760, %v1735, %v1448
      %v1769 = vsel %vm1760, %v1736, %v1450
      %v1770 = vsel %vm1760, %v1737, %v1452
      %v1771 = vsel %vm1760, %v1738, %v1454
      %v1772 = vsel %vm1760, %v1739, %v1456
      %v1773 = vsel %vm1760, %v1740, %v1458
      %v1774 = vsel %vm1760, %v1741, %v1460
      %v1775 = vsel %vm1760, %v1742, %v1462
      %v1776 = vsel %vm1760, %v1743, %v1464
      %v1777 = vsel %vm1760, %v1744, %v1466
      %v1778 = vsel %vm1760, %v1745, %v1468
      %v1779 = vsel %vm1760, %v1746, %v1470
      %v1780 = vsel %vm1760, %v1747, %v1472
      %v1781 = vsel %vm1760, %v1748, %v1474
      %v1782 = vsel %vm1760, %v1749, %v1476
      %v1783 = vsel %vm1760, %v1750, %v1478
      %v1784 = vsel %vm1760, %v1751, %v1480
      %v1785 = vsel %vm1760, %v1752, %v1482
      %v1786 = vsel %vm1760, %v1753, %v1484
      %v1787 = vsel %vm1760, %v1754, %v1486
      %v1788 = vsel %vm1760, %v1755, %v1488
      %v1789 = vsel %vm1760, %v1756, %v1490
      %v1790 = vsel %vm1760, %v1757, %v1492
      %v1791 = vsel %vm1760, %v1758, %v1494
      %v1792 = vsel %vm1760, %v1759, %v1496
      %v1793 = vld [vmem:[%s1] sm:$0xff]
      %v1794 = vld [vmem:[%s1 + $0x8] sm:$0xff]
      %v1795 = vld [vmem:[%s1 + $0x10] sm:$0xff]
      %v1796 = vld [vmem:[%s1 + $0x18] sm:$0xff]
      %v1797 = vld [vmem:[%s1 + $0x20] sm:$0xf]
      %vm1798 = vcmask 293888
      %v1800 = vsel %vm1798, %v1761, 0
      %v1803 = vsel %vm1798, %v1762, 0
      %v1806 = vsel %vm1798, %v1763, 0
      %v1809 = vsel %vm1798, %v1764, 0
      %v1812 = vsel %vm1798, %v1765, 0
      %v1815 = vsel %vm1798, %v1766, 0
      %v1818 = vsel %vm1798, %v1767, 0
      %v1821 = vsel %vm1798, %v1768, 0
      %v1824 = vsel %vm1798, %v1769, 0
      %v1827 = vsel %vm1798, %v1770, 0
      %v1830 = vsel %vm1798, %v1771, 0
      %v1833 = vsel %vm1798, %v1772, 0
      %v1836 = vsel %vm1798, %v1773, 0
      %v1839 = vsel %vm1798, %v1774, 0
      %v1842 = vsel %vm1798, %v1775, 0
      %v1845 = vsel %vm1798, %v1776, 0
      %v1848 = vsel %vm1798, %v1777, 0
      %v1851 = vsel %vm1798, %v1778, 0
      %v1854 = vsel %vm1798, %v1779, 0
      %v1857 = vsel %vm1798, %v1780, 0
      %v1860 = vsel %vm1798, %v1781, 0
      %v1863 = vsel %vm1798, %v1782, 0
      %v1866 = vsel %vm1798, %v1783, 0
      %v1869 = vsel %vm1798, %v1784, 0
      %v1872 = vsel %vm1798, %v1785, 0
      %v1875 = vsel %vm1798, %v1786, 0
      %v1878 = vsel %vm1798, %v1787, 0
      %v1881 = vsel %vm1798, %v1788, 0
      %v1884 = vsel %vm1798, %v1789, 0
      %v1887 = vsel %vm1798, %v1790, 0
      %v1890 = vsel %vm1798, %v1791, 0
      %v1893 = vsel %vm1798, %v1792, 0
      %vm1895 = vcmask 1043456
      %v1897 = vsel %vm1895, %v1797, 0
      %1899 = vmatprep.subr.mxu0 0.0
      %1900 = vmatpush1.msra.mxu0 0.0
      %1901 = vmatprep.subr.mxu0 0.0
      %1902 = vmatpush1.msra.mxu0 0.0
      %1903 = vmatprep.subr.mxu0 0.0
      %1904 = vmatpush1.msra.mxu0 0.0
      %1905 = vmatprep.subr.mxu0 0.0
      %1906 = vmatpush1.msra.mxu0 0.0
      %1907 = vmatprep.subr.mxu0 0.0
      %1908 = vmatpush1.msra.mxu0 0.0
      %1909 = vmatprep.subr.mxu0 0.0
      %1910 = vmatpush1.msra.mxu0 0.0
      %1911 = vmatprep.subr.mxu0 0.0
      %1912 = vmatpush1.msra.mxu0 0.0
      %1913 = vmatprep.subr.mxu0 0.0
      %1914 = vmatpush1.msra.mxu0 0.0
      %1915 = vmatprep.subr.mxu0 0.0
      %1916 = vmatpush1.msra.mxu0 0.0
      %1917 = vmatprep.subr.mxu0 0.0
      %1918 = vmatpush1.msra.mxu0 0.0
      %1919 = vmatprep.subr.mxu0 0.0
      %1920 = vmatpush1.msra.mxu0 0.0
      %1921 = vmatprep.subr.mxu0 0.0
      %1922 = vmatpush1.msra.mxu0 %v1897
      %1923 = vmatprep.subr.mxu0 0.0
      %1924 = vmatpush1.msra.mxu0 %v1796
      %1925 = vmatprep.subr.mxu0 0.0
      %1926 = vmatpush1.msra.mxu0 %v1795
      %1927 = vmatprep.subr.mxu0 0.0
      %1928 = vmatpush1.msra.mxu0 %v1794
      %1929 = vmatprep.subr.mxu0 0.0
      %1930 = vmatpush1.msra.mxu0 %v1793
      %1931 = vmatprep.subr.mxu0 0.0
      %1932 = vmatpush2.msra.mxu0 0.0
      %1933 = vmatprep.subr.mxu0 0.0
      %1934 = vmatpush2.msra.mxu0 0.0
      %1935 = vmatprep.subr.mxu0 0.0
      %1936 = vmatpush2.msra.mxu0 0.0
      %1937 = vmatprep.subr.mxu0 0.0
      %1938 = vmatpush2.msra.mxu0 0.0
      %1939 = vmatprep.subr.mxu0 0.0
      %1940 = vmatpush2.msra.mxu0 0.0
      %1941 = vmatprep.subr.mxu0 0.0
      %1942 = vmatpush2.msra.mxu0 0.0
      %1943 = vmatprep.subr.mxu0 0.0
      %1944 = vmatpush2.msra.mxu0 0.0
      %1945 = vmatprep.subr.mxu0 0.0
      %1946 = vmatpush2.msra.mxu0 0.0
      %1947 = vmatprep.subr.mxu0 0.0
      %1948 = vmatpush2.msra.mxu0 0.0
      %1949 = vmatprep.subr.mxu0 0.0
      %1950 = vmatpush2.msra.mxu0 0.0
      %1951 = vmatprep.subr.mxu0 0.0
      %1952 = vmatpush2.msra.mxu0 0.0
      %1953 = vmatprep.subr.mxu0 0.0
      %1954 = vmatpush2.msra.mxu0 0.0
      %1955 = vmatprep.subr.mxu0 0.0
      %1956 = vmatpush2.msra.mxu0 0.0
      %1957 = vmatprep.subr.mxu0 0.0
      %1958 = vmatpush2.msra.mxu0 0.0
      %1959 = vmatprep.subr.mxu0 0.0
      %1960 = vmatpush2.msra.mxu0 0.0
      %1961 = vmatprep.subr.mxu0 0.0
      %1962 = vmatpush2.msra.mxu0 0.0
      %1963 = vmatprep.mubr.f32.mxu0 0.0
      %1964 = vmatmul.mubr.f32.gmra.mxu0 %v1800
      %v1965 = vpop.f32.mrf.mxu0
      %v1966 = vadd.f32 0.0, %v1965
      %v1967 = vpop.f32.mrf.mxu0
      %1968 = vmatprep.mubr.f32.mxu0 0.0
      %1969 = vmatmul.mubr.f32.gmra.mxu0 %v1803
      %v1970 = vpop.f32.mrf.mxu0
      %v1971 = vadd.f32 0.0, %v1970
      %v1972 = vpop.f32.mrf.mxu0
      %1973 = vmatprep.mubr.f32.mxu0 0.0
      %1974 = vmatmul.mubr.f32.gmra.mxu0 %v1806
      %v1975 = vpop.f32.mrf.mxu0
      %v1976 = vadd.f32 0.0, %v1975
      %v1977 = vpop.f32.mrf.mxu0
      %1978 = vmatprep.mubr.f32.mxu0 0.0
      %1979 = vmatmul.mubr.f32.gmra.mxu0 %v1809
      %v1980 = vpop.f32.mrf.mxu0
      %v1981 = vadd.f32 0.0, %v1980
      %v1982 = vpop.f32.mrf.mxu0
      %1983 = vmatprep.mubr.f32.mxu0 0.0
      %1984 = vmatmul.mubr.f32.gmra.mxu0 %v1812
      %v1985 = vpop.f32.mrf.mxu0
      %v1986 = vadd.f32 0.0, %v1985
      %v1987 = vpop.f32.mrf.mxu0
      %1988 = vmatprep.mubr.f32.mxu0 0.0
      %1989 = vmatmul.mubr.f32.gmra.mxu0 %v1815
      %v1990 = vpop.f32.mrf.mxu0
      %v1991 = vadd.f32 0.0, %v1990
      %v1992 = vpop.f32.mrf.mxu0
      %1993 = vmatprep.mubr.f32.mxu0 0.0
      %1994 = vmatmul.mubr.f32.gmra.mxu0 %v1818
      %v1995 = vpop.f32.mrf.mxu0
      %v1996 = vadd.f32 0.0, %v1995
      %v1997 = vpop.f32.mrf.mxu0
      %1998 = vmatprep.mubr.f32.mxu0 0.0
      %1999 = vmatmul.mubr.f32.gmra.mxu0 %v1821
      %v2000 = vpop.f32.mrf.mxu0
      %v2001 = vadd.f32 0.0, %v2000
      %v2002 = vpop.f32.mrf.mxu0
      %2003 = vmatprep.mubr.f32.mxu0 0.0
      %2004 = vmatmul.mubr.f32.gmra.mxu0 %v1824
      %v2005 = vpop.f32.mrf.mxu0
      %v2006 = vadd.f32 0.0, %v2005
      %v2007 = vpop.f32.mrf.mxu0
      %2008 = vmatprep.mubr.f32.mxu0 0.0
      %2009 = vmatmul.mubr.f32.gmra.mxu0 %v1827
      %v2010 = vpop.f32.mrf.mxu0
      %v2011 = vadd.f32 0.0, %v2010
      %v2012 = vpop.f32.mrf.mxu0
      %2013 = vmatprep.mubr.f32.mxu0 0.0
      %2014 = vmatmul.mubr.f32.gmra.mxu0 %v1830
      %v2015 = vpop.f32.mrf.mxu0
      %v2016 = vadd.f32 0.0, %v2015
      %v2017 = vpop.f32.mrf.mxu0
      %2018 = vmatprep.mubr.f32.mxu0 0.0
      %2019 = vmatmul.mubr.f32.gmra.mxu0 %v1833
      %v2020 = vpop.f32.mrf.mxu0
      %v2021 = vadd.f32 0.0, %v2020
      %v2022 = vpop.f32.mrf.mxu0
      %2023 = vmatprep.mubr.f32.mxu0 0.0
      %2024 = vmatmul.mubr.f32.gmra.mxu0 %v1836
      %v2025 = vpop.f32.mrf.mxu0
      %v2026 = vadd.f32 0.0, %v2025
      %v2027 = vpop.f32.mrf.mxu0
      %2028 = vmatprep.mubr.f32.mxu0 0.0
      %2029 = vmatmul.mubr.f32.gmra.mxu0 %v1839
      %v2030 = vpop.f32.mrf.mxu0
      %v2031 = vadd.f32 0.0, %v2030
      %v2032 = vpop.f32.mrf.mxu0
      %2033 = vmatprep.mubr.f32.mxu0 0.0
      %2034 = vmatmul.mubr.f32.gmra.mxu0 %v1842
      %v2035 = vpop.f32.mrf.mxu0
      %v2036 = vadd.f32 0.0, %v2035
      %v2037 = vpop.f32.mrf.mxu0
      %2038 = vmatprep.mubr.f32.mxu0 0.0
      %2039 = vmatmul.mubr.f32.gmra.mxu0 %v1845
      %v2040 = vpop.f32.mrf.mxu0
      %v2041 = vadd.f32 0.0, %v2040
      %v2042 = vpop.f32.mrf.mxu0
      %2043 = vmatprep.mubr.f32.mxu0 0.0
      %2044 = vmatmul.mubr.f32.gmra.mxu0 %v1848
      %v2045 = vpop.f32.mrf.mxu0
      %v2046 = vadd.f32 0.0, %v2045
      %v2047 = vpop.f32.mrf.mxu0
      %2048 = vmatprep.mubr.f32.mxu0 0.0
      %2049 = vmatmul.mubr.f32.gmra.mxu0 %v1851
      %v2050 = vpop.f32.mrf.mxu0
      %v2051 = vadd.f32 0.0, %v2050
      %v2052 = vpop.f32.mrf.mxu0
      %2053 = vmatprep.mubr.f32.mxu0 0.0
      %2054 = vmatmul.mubr.f32.gmra.mxu0 %v1854
      %v2055 = vpop.f32.mrf.mxu0
      %v2056 = vadd.f32 0.0, %v2055
      %v2057 = vpop.f32.mrf.mxu0
      %2058 = vmatprep.mubr.f32.mxu0 0.0
      %2059 = vmatmul.mubr.f32.gmra.mxu0 %v1857
      %v2060 = vpop.f32.mrf.mxu0
      %v2061 = vadd.f32 0.0, %v2060
      %v2062 = vpop.f32.mrf.mxu0
      %2063 = vmatprep.mubr.f32.mxu0 0.0
      %2064 = vmatmul.mubr.f32.gmra.mxu0 %v1860
      %v2065 = vpop.f32.mrf.mxu0
      %v2066 = vadd.f32 0.0, %v2065
      %v2067 = vpop.f32.mrf.mxu0
      %2068 = vmatprep.mubr.f32.mxu0 0.0
      %2069 = vmatmul.mubr.f32.gmra.mxu0 %v1863
      %v2070 = vpop.f32.mrf.mxu0
      %v2071 = vadd.f32 0.0, %v2070
      %v2072 = vpop.f32.mrf.mxu0
      %2073 = vmatprep.mubr.f32.mxu0 0.0
      %2074 = vmatmul.mubr.f32.gmra.mxu0 %v1866
      %v2075 = vpop.f32.mrf.mxu0
      %v2076 = vadd.f32 0.0, %v2075
      %v2077 = vpop.f32.mrf.mxu0
      %2078 = vmatprep.mubr.f32.mxu0 0.0
      %2079 = vmatmul.mubr.f32.gmra.mxu0 %v1869
      %v2080 = vpop.f32.mrf.mxu0
      %v2081 = vadd.f32 0.0, %v2080
      %v2082 = vpop.f32.mrf.mxu0
      %2083 = vmatprep.mubr.f32.mxu0 0.0
      %2084 = vmatmul.mubr.f32.gmra.mxu0 %v1872
      %v2085 = vpop.f32.mrf.mxu0
      %v2086 = vadd.f32 0.0, %v2085
      %v2087 = vpop.f32.mrf.mxu0
      %2088 = vmatprep.mubr.f32.mxu0 0.0
      %2089 = vmatmul.mubr.f32.gmra.mxu0 %v1875
      %v2090 = vpop.f32.mrf.mxu0
      %v2091 = vadd.f32 0.0, %v2090
      %v2092 = vpop.f32.mrf.mxu0
      %2093 = vmatprep.mubr.f32.mxu0 0.0
      %2094 = vmatmul.mubr.f32.gmra.mxu0 %v1878
      %v2095 = vpop.f32.mrf.mxu0
      %v2096 = vadd.f32 0.0, %v2095
      %v2097 = vpop.f32.mrf.mxu0
      %2098 = vmatprep.mubr.f32.mxu0 0.0
      %2099 = vmatmul.mubr.f32.gmra.mxu0 %v1881
      %v2100 = vpop.f32.mrf.mxu0
      %v2101 = vadd.f32 0.0, %v2100
      %v2102 = vpop.f32.mrf.mxu0
      %2103 = vmatprep.mubr.f32.mxu0 0.0
      %2104 = vmatmul.mubr.f32.gmra.mxu0 %v1884
      %v2105 = vpop.f32.mrf.mxu0
      %v2106 = vadd.f32 0.0, %v2105
      %v2107 = vpop.f32.mrf.mxu0
      %2108 = vmatprep.mubr.f32.mxu0 0.0
      %2109 = vmatmul.mubr.f32.gmra.mxu0 %v1887
      %v2110 = vpop.f32.mrf.mxu0
      %v2111 = vadd.f32 0.0, %v2110
      %v2112 = vpop.f32.mrf.mxu0
      %2113 = vmatprep.mubr.f32.mxu0 0.0
      %2114 = vmatmul.mubr.f32.gmra.mxu0 %v1890
      %v2115 = vpop.f32.mrf.mxu0
      %v2116 = vadd.f32 0.0, %v2115
      %v2117 = vpop.f32.mrf.mxu0
      %2118 = vmatprep.mubr.f32.mxu0 0.0
      %2119 = vmatmul.mubr.f32.gmra.mxu0 %v1893
      %v2120 = vpop.f32.mrf.mxu0
      %v2121 = vadd.f32 0.0, %v2120
      %v2122 = vpop.f32.mrf.mxu0
      %2123 = vdwg.mxu0
      %2124 = vst [vmem:[%s208] sm:$0xff] %v1966
      %2125 = vst [vmem:[%s208 + $0x8] sm:$0xff] %v1971
      %2126 = vst [vmem:[%s208 + $0x10] sm:$0xff] %v1976
      %2127 = vst [vmem:[%s208 + $0x18] sm:$0xff] %v1981
      %2128 = vst [vmem:[%s208 + $0x20] sm:$0xff] %v1986
      %2129 = vst [vmem:[%s208 + $0x28] sm:$0xff] %v1991
      %2130 = vst [vmem:[%s208 + $0x30] sm:$0xff] %v1996
      %2131 = vst [vmem:[%s208 + $0x38] sm:$0xff] %v2001
      %2132 = vst [vmem:[%s208 + $0x40] sm:$0xff] %v2006
      %2133 = vst [vmem:[%s208 + $0x48] sm:$0xff] %v2011
      %2134 = vst [vmem:[%s208 + $0x50] sm:$0xff] %v2016
      %2135 = vst [vmem:[%s208 + $0x58] sm:$0xff] %v2021
      %2136 = vst [vmem:[%s208 + $0x60] sm:$0xff] %v2026
      %2137 = vst [vmem:[%s208 + $0x68] sm:$0xff] %v2031
      %2138 = vst [vmem:[%s208 + $0x70] sm:$0xff] %v2036
      %2139 = vst [vmem:[%s208 + $0x78] sm:$0xff] %v2041
      %2140 = vst [vmem:[%s208 + $0x80] sm:$0xff] %v2046
      %2141 = vst [vmem:[%s208 + $0x88] sm:$0xff] %v2051
      %2142 = vst [vmem:[%s208 + $0x90] sm:$0xff] %v2056
      %2143 = vst [vmem:[%s208 + $0x98] sm:$0xff] %v2061
      %2144 = vst [vmem:[%s208 + $0xa0] sm:$0xff] %v2066
      %2145 = vst [vmem:[%s208 + $0xa8] sm:$0xff] %v2071
      %2146 = vst [vmem:[%s208 + $0xb0] sm:$0xff] %v2076
      %2147 = vst [vmem:[%s208 + $0xb8] sm:$0xff] %v2081
      %2148 = vst [vmem:[%s208 + $0xc0] sm:$0xff] %v2086
      %2149 = vst [vmem:[%s208 + $0xc8] sm:$0xff] %v2091
      %2150 = vst [vmem:[%s208 + $0xd0] sm:$0xff] %v2096
      %2151 = vst [vmem:[%s208 + $0xd8] sm:$0xff] %v2101
      %2152 = vst [vmem:[%s208 + $0xe0] sm:$0xff] %v2106
      %2153 = vst [vmem:[%s208 + $0xe8] sm:$0xff] %v2111
      %2154 = vst [vmem:[%s208 + $0xf0] sm:$0xff] %v2116
      %2155 = vst [vmem:[%s208 + $0xf8] sm:$0xff] %v2121
      %v2156 = vadd.f32 %v1966, %v1971
      %v2157 = vadd.f32 %v2156, %v1976
      %v2158 = vadd.f32 %v2157, %v1981
      %v2159 = vadd.f32 %v2158, %v1986
      %v2160 = vadd.f32 %v2159, %v1991
      %v2161 = vadd.f32 %v2160, %v1996
      %v2162 = vadd.f32 %v2161, %v2001
      %v2163 = vadd.f32 %v2162, %v2006
      %v2164 = vadd.f32 %v2163, %v2011
      %v2165 = vadd.f32 %v2164, %v2016
      %v2166 = vadd.f32 %v2165, %v2021
      %v2167 = vadd.f32 %v2166, %v2026
      %v2168 = vadd.f32 %v2167, %v2031
      %v2169 = vadd.f32 %v2168, %v2036
      %v2170 = vadd.f32 %v2169, %v2041
      %v2171 = vadd.f32 %v2170, %v2046
      %v2172 = vadd.f32 %v2171, %v2051
      %v2173 = vadd.f32 %v2172, %v2056
      %v2174 = vadd.f32 %v2173, %v2061
      %v2175 = vadd.f32 %v2174, %v2066
      %v2176 = vadd.f32 %v2175, %v2071
      %v2177 = vadd.f32 %v2176, %v2076
      %v2178 = vadd.f32 %v2177, %v2081
      %v2179 = vadd.f32 %v2178, %v2086
      %v2180 = vadd.f32 %v2179, %v2091
      %v2181 = vadd.f32 %v2180, %v2096
      %v2182 = vadd.f32 %v2181, %v2101
      %v2183 = vadd.f32 %v2182, %v2106
      %v2184 = vadd.f32 %v2183, %v2111
      %v2185 = vadd.f32 %v2184, %v2116
      %v2186 = vadd.f32 %v2185, %v2121
      %v2187 = vrot.slane %v2186, 4
      %v2188 = vadd.f32 %v2186, %v2187
      %v2189 = vrot.slane %v2188, 2
      %v2190 = vadd.f32 %v2188, %v2189
      %v2191 = vrot.slane %v2190, 1
      %v2192 = vadd.f32 %v2190, %v2191
      %2193 = vst [vmem:[%s211] sm:$0x1] %v2192
      %v2194 = vmul.f32 %v1966, %v1966
      %v2195 = vmul.f32 %v1971, %v1971
      %v2196 = vmul.f32 %v1976, %v1976
      %v2197 = vmul.f32 %v1981, %v1981
      %v2198 = vmul.f32 %v1986, %v1986
      %v2199 = vmul.f32 %v1991, %v1991
      %v2200 = vmul.f32 %v1996, %v1996
      %v2201 = vmul.f32 %v2001, %v2001
      %v2202 = vmul.f32 %v2006, %v2006
      %v2203 = vmul.f32 %v2011, %v2011
      %v2204 = vmul.f32 %v2016, %v2016
      %v2205 = vmul.f32 %v2021, %v2021
      %v2206 = vmul.f32 %v2026, %v2026
      %v2207 = vmul.f32 %v2031, %v2031
      %v2208 = vmul.f32 %v2036, %v2036
      %v2209 = vmul.f32 %v2041, %v2041
      %v2210 = vmul.f32 %v2046, %v2046
      %v2211 = vmul.f32 %v2051, %v2051
      %v2212 = vmul.f32 %v2056, %v2056
      %v2213 = vmul.f32 %v2061, %v2061
      %v2214 = vmul.f32 %v2066, %v2066
      %v2215 = vmul.f32 %v2071, %v2071
      %v2216 = vmul.f32 %v2076, %v2076
      %v2217 = vmul.f32 %v2081, %v2081
      %v2218 = vmul.f32 %v2086, %v2086
      %v2219 = vmul.f32 %v2091, %v2091
      %v2220 = vmul.f32 %v2096, %v2096
      %v2221 = vmul.f32 %v2101, %v2101
      %v2222 = vmul.f32 %v2106, %v2106
      %v2223 = vmul.f32 %v2111, %v2111
      %v2224 = vmul.f32 %v2116, %v2116
      %v2225 = vmul.f32 %v2121, %v2121
      %v2226 = vadd.f32 %v2194, %v2195
      %v2227 = vadd.f32 %v2226, %v2196
      %v2228 = vadd.f32 %v2227, %v2197
      %v2229 = vadd.f32 %v2228, %v2198
      %v2230 = vadd.f32 %v2229, %v2199
      %v2231 = vadd.f32 %v2230, %v2200
      %v2232 = vadd.f32 %v2231, %v2201
      %v2233 = vadd.f32 %v2232, %v2202
      %v2234 = vadd.f32 %v2233, %v2203
      %v2235 = vadd.f32 %v2234, %v2204
      %v2236 = vadd.f32 %v2235, %v2205
      %v2237 = vadd.f32 %v2236, %v2206
      %v2238 = vadd.f32 %v2237, %v2207
      %v2239 = vadd.f32 %v2238, %v2208
      %v2240 = vadd.f32 %v2239, %v2209
      %v2241 = vadd.f32 %v2240, %v2210
      %v2242 = vadd.f32 %v2241, %v2211
      %v2243 = vadd.f32 %v2242, %v2212
      %v2244 = vadd.f32 %v2243, %v2213
      %v2245 = vadd.f32 %v2244, %v2214
      %v2246 = vadd.f32 %v2245, %v2215
      %v2247 = vadd.f32 %v2246, %v2216
      %v2248 = vadd.f32 %v2247, %v2217
      %v2249 = vadd.f32 %v2248, %v2218
      %v2250 = vadd.f32 %v2249, %v2219
      %v2251 = vadd.f32 %v2250, %v2220
      %v2252 = vadd.f32 %v2251, %v2221
      %v2253 = vadd.f32 %v2252, %v2222
      %v2254 = vadd.f32 %v2253, %v2223
      %v2255 = vadd.f32 %v2254, %v2224
      %v2256 = vadd.f32 %v2255, %v2225
      %v2257 = vrot.slane %v2256, 4
      %v2258 = vadd.f32 %v2256, %v2257
      %v2259 = vrot.slane %v2258, 2
      %v2260 = vadd.f32 %v2258, %v2259
      %v2261 = vrot.slane %v2260, 1
      %v2262 = vadd.f32 %v2260, %v2261
      %2263 = vst [vmem:[%s214] sm:$0x1] %v2262
      %p2264 = scmp.lt.s32.totalorder %s16, 1
      %s2265 = scalar_select %p2264, %s16, 1
      %s2266 = smul.addr %s2265, 32
      %s2267 = smul.addr %s2266, 8
      %s2268 = scalar_lea.vmem %s2, %s2267
      %p2269 = scmp.lt.s32.totalorder %s16, 1
      %s2270 = scalar_select %p2269, %s16, 1
      %s2271 = scalar_lea.vmem %s3, %s2270
      %p2272 = scmp.lt.s32.totalorder %s16, 1
      %s2273 = scalar_select %p2272, %s16, 1
      %s2274 = scalar_lea.vmem %s4, %s2273
      // Predicated region
      $region29: #{conv_block.2} parent=27 // pred_check
        %p2275 = pneg %p81
      $region30: #{conv_block.2} parent=27 // pred_check_branch
        %2277 = sbr.rel (%p2275) target = $region32
      $region31: #{conv_block.2} parent=27 // pred_region
        _
      $region32: #{conv_block.2} parent=27 // pred_fallthru
        _
      // Predicated region
      $region33: #{conv_block.2} parent=27 // pred_check
        %p2278 = pneg %p107
      $region34: #{conv_block.2} parent=27 // pred_check_branch
        %2280 = sbr.rel (%p2278) target = $region36
      $region35: #{conv_block.2} parent=27 // pred_region
        _
      $region36: #{conv_block.2} parent=27 // pred_fallthru
        _
      // Predicated region
      $region37: #{conv_block.2} parent=27 // pred_check
        %p2281 = pneg %p133
      $region38: #{conv_block.2} parent=27 // pred_check_branch
        %2283 = sbr.rel (%p2281) target = $region40
      $region39: #{conv_block.2} parent=27 // pred_region
        _
      $region40: #{conv_block.2} parent=27 // pred_fallthru
        _
    $region28: #{conv_block.2} parent=5 // pred_fallthru
      _
    %p2284 = scmp.le.s32.totalorder 2, %s11
    // Predicated region
    $region41: #{conv_block.2} parent=5 // pred_check
      %p2285 = pneg %p2284
    $region42: #{conv_block.2} parent=5 // pred_check_branch
      %2287 = sbr.rel (%p2285) target = $region44
    $region43: #{conv_block.2} parent=5 // pred_region
      %s2288 = ssub.s32 %s11, 2
      // Predicated region
      $region45: #{conv_block.2} parent=43 // pred_check
        %p2289 = pneg %p87
      $region46: #{conv_block.2} parent=43 // pred_check_branch
        %2291 = sbr.rel (%p2289) target = $region48
      $region47: #{conv_block.2} parent=43 // pred_region
        %p2292 = scmp.lt.s32.totalorder %s17, 1
        %s2293 = scalar_select %p2292, %s17, 1
        %s2294 = smul.addr %s2293, 32
        %s2295 = smul.addr %s2294, 8
        %s2296 = scalar_lea.vmem %s2, %s2295
      $region48: #{conv_block.2} parent=43 // pred_fallthru
        _
      // Predicated region
      $region49: #{conv_block.2} parent=43 // pred_check
        %p2297 = pneg %p113
      $region50: #{conv_block.2} parent=43 // pred_check_branch
        %2299 = sbr.rel (%p2297) target = $region52
      $region51: #{conv_block.2} parent=43 // pred_region
        %p2300 = scmp.lt.s32.totalorder %s17, 1
        %s2301 = scalar_select %p2300, %s17, 1
        %s2302 = scalar_lea.vmem %s3, %s2301
      $region52: #{conv_block.2} parent=43 // pred_fallthru
        _
      // Predicated region
      $region53: #{conv_block.2} parent=43 // pred_check
        %p2303 = pneg %p139
      $region54: #{conv_block.2} parent=43 // pred_check_branch
        %2305 = sbr.rel (%p2303) target = $region56
      $region55: #{conv_block.2} parent=43 // pred_region
        %p2306 = scmp.lt.s32.totalorder %s17, 1
        %s2307 = scalar_select %p2306, %s17, 1
        %s2308 = scalar_lea.vmem %s4, %s2307
      $region56: #{conv_block.2} parent=43 // pred_fallthru
        _
    $region44: #{conv_block.2} parent=5 // pred_fallthru
      _
  $region6: #{conv_block.2} parent=0 // loop_footer
    %s15 = sadd.s32 1, %s11
  $region7: #{conv_block.2} parent=0 // loop_footer_branch
    %10 = sbr.rel target = $region3
  $region8: #{conv_block.2} parent=0 // loop_exit
    _

</llo_original>
